<compile_context>
chip_gen: v6e
topology: v6e:2x2x1
jax: 0.10.0
libtpu: 0.0.40
codegen_flags: <defaults>
</compile_context>

<pallas_src>
import functools

import numpy as np
import jax
import jax.numpy as jnp
from jax.experimental import pallas as pl
from jax.experimental.pallas import tpu as pltpu

C_PAD = 128     # every channel dim padded to one lane-dense, 128-wide vreg
EPS = 1e-5      # BatchNorm2d default eps


# ---------------------------------------------------------------------------
# Fused Pallas kernel
# ---------------------------------------------------------------------------
def _bn_affine(acc, m_valid, gamma, beta, relu):
    """Training-mode BatchNorm2d over m_valid (N*H*W) rows [+ ReLU].

    Two-pass (centered) variance for numerical robustness (review item).
    Padded channel lanes stay exactly 0 because gamma/beta are zero-padded.
    """
    inv_m = 1.0 / float(m_valid)
    mean = jnp.sum(acc, axis=0, keepdims=True) * inv_m
    cen = acc - mean
    var = jnp.sum(cen * cen, axis=0, keepdims=True) * inv_m
    y = gamma * (cen * jax.lax.rsqrt(var + EPS)) + beta
    return jnp.maximum(y, 0.0) if relu else y


def _conv_block(a_prev, g_ref, ws_ref):
    """Conv2d(k=3, s=2, p=1) as exactly TWO matmuls.

    g_ref  : (9*m_out, m_in) bf16 0/1 stacked gather (tap-major rows),
             precomputed on the host.
    ws_ref : (9*C_PAD, C_PAD) f32 stacked weights, row index = t*C_PAD + cin.
    """
    m_out = g_ref.shape[0] // 9
    # 1) stacked gather: all 9 taps' patches in one MXU matmul.
    p_all = jnp.dot(g_ref[...].astype(jnp.float32), a_prev,
                    preferred_element_type=jnp.float32)        # (9*m_out, 128)
    # 2) rearrange tap-major rows -> lane-stacked patches (in-VMEM im2col):
    #    pure 128-lane-aligned slice/concat copies, no cross-lane shuffles.
    patches = jnp.concatenate(
        [p_all[t * m_out:(t + 1) * m_out, :] for t in range(9)], axis=1)
    # 3) one stacked-contraction conv matmul, K = 9*128 = 1152.
    return jnp.dot(patches, ws_ref[...], preferred_element_type=jnp.float32)


def layer3_kernel(x1_ref, w1s_ref, g2_ref, w2s_ref, g3_ref, w3s_ref,
                  pool_ref, wfc_ref, vecs_ref, *out_refs):
    # vecs_ref rows: 0:g1 1:be1 2:g2 3:be2 4:g3 5:be3 6:bfc 7:zeros
    m1 = x1_ref.shape[0]
    m2 = g2_ref.shape[0] // 9
    m3 = g3_ref.shape[0] // 9

    # Block 1: conv1 was im2col'd on the host -> a single small matmul (K=32).
    a1 = jnp.dot(x1_ref[...], w1s_ref[...], preferred_element_type=jnp.float32)
    a1 = _bn_affine(a1, m1, vecs_ref[0:1, :], vecs_ref[1:2, :], relu=True)

    a2 = _conv_block(a1, g2_ref, w2s_ref)
    a2 = _bn_affine(a2, m2, vecs_ref[2:3, :], vecs_ref[3:4, :], relu=True)

    a3 = _conv_block(a2, g3_ref, w3s_ref)
    a3 = _bn_affine(a3, m3, vecs_ref[4:5, :], vecs_ref[5:6, :], relu=False)

    # AdaptiveAvgPool2d(1) as a per-image segment-mean matmul, fused with FC.
    pooled = jnp.dot(pool_ref[...], a3, preferred_element_type=jnp.float32)
    out_refs[0][...] = (jnp.dot(pooled, wfc_ref[...],
                                preferred_element_type=jnp.float32)
                        + vecs_ref[6:7, :])
    if len(out_refs) == 2:           # get_features=True variant only
        out_refs[1][...] = pooled


# ---------------------------------------------------------------------------
# One-time host-side parameter / constant preparation (runs once at init)
# ---------------------------------------------------------------------------
def _out_hw(h):                      # Conv2d(k=3, s=2, p=1) output extent
    return (h - 1) // 2 + 1


def _gather_matrix(n, hi, wi, ho, wo):
    """0/1 stacked row-selection matrix (9*m_out, m_in), tap-major rows.

    Row t*m_out + i selects the layer input row feeding tap t of output
    position i (all-zero row when the tap lands in the zero padding).
    Exact in bf16 (values are 0/1), halving its DMA/VMEM footprint.
    """
    m_in, m_out = n * hi * wi, n * ho * wo
    g = np.zeros((9, m_out, m_in), np.float32)
    for t in range(9):
        kh, kw = divmod(t, 3)
        for i in range(m_out):
            img, rem = divmod(i, ho * wo)
            oy, ox = divmod(rem, wo)
            iy, ix = 2 * oy + kh - 1, 2 * ox + kw - 1
            if 0 <= iy < hi and 0 <= ix < wi:
                g[t, i, img * hi * wi + iy * wi + ix] = 1.0
    return jnp.asarray(g.reshape(9 * m_out, m_in), jnp.bfloat16)


def _stack_conv_w(w_oihw, cin_pad):
    # (Cout, Cin, 3, 3) -> (9, cin_pad, C_PAD) -> (9*cin_pad, C_PAD), row index
    # = t*cin_pad + cin, matching the stacked patches / host im2col column order.
    cout, cin, kh, kw = w_oihw.shape
    w = np.asarray(w_oihw, np.float32).transpose(2, 3, 1, 0)   # (kh, kw, cin, cout)
    w = w.reshape(kh * kw, cin, cout)
    w = np.pad(w, ((0, 0), (0, cin_pad - cin), (0, C_PAD - cout)))
    return jnp.asarray(w.reshape(kh * kw * cin_pad, C_PAD))


def _vec_pad(v):
    v = np.asarray(v, np.float32).reshape(-1)
    return np.pad(v, (0, C_PAD - v.shape[0]))


def prepare_params(params, n, hin, win):
    h1, wd1 = _out_hw(hin), _out_hw(win)
    h2, wd2 = _out_hw(h1), _out_hw(wd1)
    h3, wd3 = _out_hw(h2), _out_hw(wd2)
    m3 = n * h3 * wd3
    npad = ((n + 7) // 8) * 8                  # aligned (8k, 128) output tiles
    cin = int(params["w1"].shape[1])
    k1 = 9 * cin
    k1p = ((k1 + 7) // 8) * 8                  # layer-1 contraction, sublane-aligned

    w1s = _stack_conv_w(params["w1"], cin)                       # (27, 128)
    w1s = jnp.pad(w1s, ((0, k1p - k1), (0, 0)))                  # (32, 128)
    w2s = _stack_conv_w(params["w2"], C_PAD)                     # (1152, 128)
    w3s = _stack_conv_w(params["w3"], C_PAD)                     # (1152, 128)
    g2 = _gather_matrix(n, h1, wd1, h2, wd2)                     # (9*m2, m1) bf16
    g3 = _gather_matrix(n, h2, wd2, h3, wd3)                     # (9*m3, m2) bf16

    # AdaptiveAvgPool2d(1): per-image mean over the h3*w3 positions.
    pool = np.zeros((npad, m3), np.float32)
    for i in range(n):
        pool[i, i * h3 * wd3:(i + 1) * h3 * wd3] = 1.0 / (h3 * wd3)

    n_cls, n_feat = params["wfc"].shape                          # (10, 16)
    wfc = np.zeros((C_PAD, C_PAD), np.float32)
    wfc[:n_feat, :n_cls] = np.asarray(params["wfc"], np.float32).T

    # Pack all (1,128) per-channel vectors into ONE (8,128) tile / one DMA.
    vecs = np.stack([_vec_pad(params["g1"]), _vec_pad(params["be1"]),
                     _vec_pad(params["g2"]), _vec_pad(params["be2"]),
                     _vec_pad(params["g3"]), _vec_pad(params["be3"]),
                     _vec_pad(params["bfc"]),
                     np.zeros((C_PAD,), np.float32)])
    # NOTE: conv biases params["b1".."b3"] are deliberately unused: training-
    # mode BatchNorm subtracts the per-channel batch mean, cancelling them.

    dims = dict(n=n, hin=hin, win=win, h1=h1, wd1=wd1, cin=cin, k1=k1, k1p=k1p,
                npad=npad, n_cls=int(n_cls), n_feat=int(n_feat))
    return dict(w1s=w1s, w2s=w2s, w3s=w3s, g2=g2, g3=g3,
                pool=jnp.asarray(pool), wfc=jnp.asarray(wfc),
                vecs=jnp.asarray(vecs), dims=dims)


# ---------------------------------------------------------------------------
# Forward wrapper (per-call: tiny layer-1 im2col + one pallas_call)
# ---------------------------------------------------------------------------
def layer3_forward(prep, x_nchw, get_features=False):
    d = prep["dims"]
    n, hin, win = d["n"], d["hin"], d["win"]
    assert x_nchw.shape == (n, d["cin"], hin, win), x_nchw.shape
    h1, wd1 = d["h1"], d["wd1"]

    # Layer-1 im2col on the host side of the kernel boundary: (m1, 27) ~ KiB.
    x = jnp.transpose(x_nchw, (0, 2, 3, 1)).astype(jnp.float32)   # NHWC
    xp = jnp.pad(x, ((0, 0), (1, 1), (1, 1), (0, 0)))
    cols = []
    for kh in range(3):
        for kw in range(3):
            cols.append(xp[:, kh:kh + 2 * h1:2, kw:kw + 2 * wd1:2, :])
    x1 = jnp.concatenate(cols, axis=-1).reshape(n * h1 * wd1, d["k1"])
    x1 = jnp.pad(x1, ((0, 0), (0, d["k1p"] - d["k1"])))

    out_shapes = (jax.ShapeDtypeStruct((d["npad"], C_PAD), jnp.float32),)
    if get_features:
        out_shapes += (jax.ShapeDtypeStruct((d["npad"], C_PAD), jnp.float32),)

    res = pl.pallas_call(
        layer3_kernel,
        out_shape=out_shapes,
        in_specs=[pl.BlockSpec(memory_space=pltpu.MemorySpace.VMEM)] * 9,
        out_specs=tuple(pl.BlockSpec(memory_space=pltpu.MemorySpace.VMEM)
                        for _ in out_shapes),
    )(x1, prep["w1s"], prep["g2"], prep["w2s"], prep["g3"], prep["w3s"],
      prep["pool"], prep["wfc"], prep["vecs"])

    out = res[0][:n, :d["n_cls"]]
    if get_features:
        feats = res[1][:n, :d["n_feat"]].reshape(n, d["n_feat"], 1, 1)
        return out, feats
    return out


# ---------------------------------------------------------------------------
# Parameter init (deterministic, mirrors the module's parameter shapes)
# ---------------------------------------------------------------------------
def init_params(key):
    ks = jax.random.split(key, 8)
    p = {}
    # Conv2d(3, 64, 3, 2, 1) + BatchNorm2d(64)
    p["w1"] = 0.1 * jax.random.normal(ks[0], (64, 3, 3, 3), jnp.float32)
    p["b1"] = 0.01 * jax.random.normal(ks[1], (64,), jnp.float32)
    p["g1"] = jnp.ones((64,), jnp.float32)
    p["be1"] = jnp.zeros((64,), jnp.float32)
    # Conv2d(64, 32, 3, 2, 1) + BatchNorm2d(32)
    p["w2"] = 0.1 * jax.random.normal(ks[2], (32, 64, 3, 3), jnp.float32)
    p["b2"] = 0.01 * jax.random.normal(ks[3], (32,), jnp.float32)
    p["g2"] = jnp.ones((32,), jnp.float32)
    p["be2"] = jnp.zeros((32,), jnp.float32)
    # Conv2d(32, 16, 3, 2, 1) + BatchNorm2d(16)
    p["w3"] = 0.1 * jax.random.normal(ks[4], (16, 32, 3, 3), jnp.float32)
    p["b3"] = 0.01 * jax.random.normal(ks[5], (16,), jnp.float32)
    p["g3"] = jnp.ones((16,), jnp.float32)
    p["be3"] = jnp.zeros((16,), jnp.float32)
    # Linear(16, 10)
    p["wfc"] = 0.1 * jax.random.normal(ks[6], (10, 16), jnp.float32)
    p["bfc"] = 0.01 * jax.random.normal(ks[7], (10,), jnp.float32)
    return p


if __name__ == "__main__":
    key = jax.random.PRNGKey(0)
    pkey, xkey = jax.random.split(key)
    params = init_params(pkey)
    x = jax.random.normal(xkey, (2, 3, 16, 16), jnp.float32)   # NCHW, like PyTorch

    prep = prepare_params(params, x.shape[0], x.shape[2], x.shape[3])  # once

    fwd = jax.jit(functools.partial(layer3_forward, prep))
    out = jax.block_until_ready(fwd(x))
    assert out.shape == (2, 10), out.shape

    fwd_feat = jax.jit(lambda xx: layer3_forward(prep, xx, get_features=True))
    out2, feats = jax.block_until_ready(fwd_feat(x))
    assert out2.shape == (2, 10) and feats.shape == (2, 16, 1, 1)

    print("KERNEL_OK")
</pallas_src>

<mosaic_0001>
module attributes {stable_mosaic.version = 11 : i64} {
  func.func @layer3_kernel(%arg0: memref<128x32xf32, #tpu.memory_space<vmem>>, %arg1: memref<32x128xf32, #tpu.memory_space<vmem>>, %arg2: memref<288x128xbf16, #tpu.memory_space<vmem>>, %arg3: memref<1152x128xf32, #tpu.memory_space<vmem>>, %arg4: memref<72x32xbf16, #tpu.memory_space<vmem>>, %arg5: memref<1152x128xf32, #tpu.memory_space<vmem>>, %arg6: memref<8x8xf32, #tpu.memory_space<vmem>>, %arg7: memref<128x128xf32, #tpu.memory_space<vmem>>, %arg8: memref<8x128xf32, #tpu.memory_space<vmem>>, %arg9: memref<8x128xf32, #tpu.memory_space<vmem>>) attributes {dimension_semantics = [], scalar_prefetch = 0 : i64, scratch_operands = 0 : i64, tpu.core_type = #tpu.core_type<tc>} {
    %c0 = arith.constant 0 : index
    %c0_0 = arith.constant 0 : index
    %0 = vector.load %arg0[%c0, %c0_0] : memref<128x32xf32, #tpu.memory_space<vmem>>, vector<128x32xf32>
    %c0_1 = arith.constant 0 : index
    %c0_2 = arith.constant 0 : index
    %1 = vector.load %arg1[%c0_1, %c0_2] : memref<32x128xf32, #tpu.memory_space<vmem>>, vector<32x128xf32>
    %cst = arith.constant dense<0.000000e+00> : vector<128x128xf32>
    %2 = tpu.matmul %0, %1, %cst {dimension_numbers = #tpu.dot_dimension_numbers<[1], [0], [0], [1], [0, 0, 1, 1], [], []>} : vector<128x32xf32>, vector<32x128xf32>, vector<128x128xf32> -> vector<128x128xf32>
    %c0_3 = arith.constant 0 : index
    %c0_4 = arith.constant 0 : index
    %3 = vector.load %arg8[%c0_3, %c0_4] : memref<8x128xf32, #tpu.memory_space<vmem>>, vector<1x128xf32>
    %c1 = arith.constant 1 : index
    %c0_5 = arith.constant 0 : index
    %4 = vector.load %arg8[%c1, %c0_5] : memref<8x128xf32, #tpu.memory_space<vmem>>, vector<1x128xf32>
    %cst_6 = arith.constant dense<0.000000e+00> : vector<128xf32>
    %5 = vector.multi_reduction <add>, %2, %cst_6 [0] : vector<128x128xf32> to vector<128xf32>
    %6 = vector.shape_cast %5 : vector<128xf32> to vector<1x128xf32>
    %cst_7 = arith.constant 7.812500e-03 : f32
    %7 = vector.broadcast %cst_7 : f32 to vector<1x128xf32>
    %8 = arith.mulf %6, %7 : vector<1x128xf32>
    %9 = vector.broadcast %8 : vector<1x128xf32> to vector<128x128xf32>
    %10 = arith.subf %2, %9 : vector<128x128xf32>
    %11 = arith.mulf %10, %10 : vector<128x128xf32>
    %cst_8 = arith.constant dense<0.000000e+00> : vector<128xf32>
    %12 = vector.multi_reduction <add>, %11, %cst_8 [0] : vector<128x128xf32> to vector<128xf32>
    %13 = vector.shape_cast %12 : vector<128xf32> to vector<1x128xf32>
    %cst_9 = arith.constant 7.812500e-03 : f32
    %14 = vector.broadcast %cst_9 : f32 to vector<1x128xf32>
    %15 = arith.mulf %13, %14 : vector<1x128xf32>
    %cst_10 = arith.constant 9.99999974E-6 : f32
    %16 = vector.broadcast %cst_10 : f32 to vector<1x128xf32>
    %17 = arith.addf %15, %16 : vector<1x128xf32>
    %18 = math.rsqrt %17 : vector<1x128xf32>
    %19 = vector.broadcast %18 : vector<1x128xf32> to vector<128x128xf32>
    %20 = arith.mulf %10, %19 : vector<128x128xf32>
    %21 = vector.broadcast %3 : vector<1x128xf32> to vector<128x128xf32>
    %22 = arith.mulf %21, %20 : vector<128x128xf32>
    %23 = vector.broadcast %4 : vector<1x128xf32> to vector<128x128xf32>
    %24 = arith.addf %22, %23 : vector<128x128xf32>
    %cst_11 = arith.constant 0.000000e+00 : f32
    %25 = vector.broadcast %cst_11 : f32 to vector<128x128xf32>
    %26 = arith.maximumf %24, %25 : vector<128x128xf32>
    %c0_12 = arith.constant 0 : index
    %c0_13 = arith.constant 0 : index
    %27 = vector.load %arg2[%c0_12, %c0_13] : memref<288x128xbf16, #tpu.memory_space<vmem>>, vector<288x128xbf16>
    %28 = arith.extf %27 : vector<288x128xbf16> to vector<288x128xf32>
    %cst_14 = arith.constant dense<0.000000e+00> : vector<288x128xf32>
    %29 = tpu.matmul %28, %26, %cst_14 {dimension_numbers = #tpu.dot_dimension_numbers<[1], [0], [0], [1], [0, 0, 1, 1], [], []>} : vector<288x128xf32>, vector<128x128xf32>, vector<288x128xf32> -> vector<288x128xf32>
    %30 = vector.extract_strided_slice %29 {offsets = [0, 0], sizes = [32, 128], strides = [1, 1]} : vector<288x128xf32> to vector<32x128xf32>
    %31 = vector.extract_strided_slice %29 {offsets = [32, 0], sizes = [32, 128], strides = [1, 1]} : vector<288x128xf32> to vector<32x128xf32>
    %32 = vector.extract_strided_slice %29 {offsets = [64, 0], sizes = [32, 128], strides = [1, 1]} : vector<288x128xf32> to vector<32x128xf32>
    %33 = vector.extract_strided_slice %29 {offsets = [96, 0], sizes = [32, 128], strides = [1, 1]} : vector<288x128xf32> to vector<32x128xf32>
    %34 = vector.extract_strided_slice %29 {offsets = [128, 0], sizes = [32, 128], strides = [1, 1]} : vector<288x128xf32> to vector<32x128xf32>
    %35 = vector.extract_strided_slice %29 {offsets = [160, 0], sizes = [32, 128], strides = [1, 1]} : vector<288x128xf32> to vector<32x128xf32>
    %36 = vector.extract_strided_slice %29 {offsets = [192, 0], sizes = [32, 128], strides = [1, 1]} : vector<288x128xf32> to vector<32x128xf32>
    %37 = vector.extract_strided_slice %29 {offsets = [224, 0], sizes = [32, 128], strides = [1, 1]} : vector<288x128xf32> to vector<32x128xf32>
    %38 = vector.extract_strided_slice %29 {offsets = [256, 0], sizes = [32, 128], strides = [1, 1]} : vector<288x128xf32> to vector<32x128xf32>
    %39 = tpu.concatenate %30, %31, %32, %33, %34, %35, %36, %37, %38 in 1 : vector<32x128xf32>, vector<32x128xf32>, vector<32x128xf32>, vector<32x128xf32>, vector<32x128xf32>, vector<32x128xf32>, vector<32x128xf32>, vector<32x128xf32>, vector<32x128xf32> -> vector<32x1152xf32>
    %c0_15 = arith.constant 0 : index
    %c0_16 = arith.constant 0 : index
    %40 = vector.load %arg3[%c0_15, %c0_16] : memref<1152x128xf32, #tpu.memory_space<vmem>>, vector<1152x128xf32>
    %cst_17 = arith.constant dense<0.000000e+00> : vector<32x128xf32>
    %41 = tpu.matmul %39, %40, %cst_17 {dimension_numbers = #tpu.dot_dimension_numbers<[1], [0], [0], [1], [0, 0, 1, 1], [], []>} : vector<32x1152xf32>, vector<1152x128xf32>, vector<32x128xf32> -> vector<32x128xf32>
    %c2 = arith.constant 2 : index
    %c0_18 = arith.constant 0 : index
    %42 = vector.load %arg8[%c2, %c0_18] : memref<8x128xf32, #tpu.memory_space<vmem>>, vector<1x128xf32>
    %c3 = arith.constant 3 : index
    %c0_19 = arith.constant 0 : index
    %43 = vector.load %arg8[%c3, %c0_19] : memref<8x128xf32, #tpu.memory_space<vmem>>, vector<1x128xf32>
    %cst_20 = arith.constant dense<0.000000e+00> : vector<128xf32>
    %44 = vector.multi_reduction <add>, %41, %cst_20 [0] : vector<32x128xf32> to vector<128xf32>
    %45 = vector.shape_cast %44 : vector<128xf32> to vector<1x128xf32>
    %cst_21 = arith.constant 3.125000e-02 : f32
    %46 = vector.broadcast %cst_21 : f32 to vector<1x128xf32>
    %47 = arith.mulf %45, %46 : vector<1x128xf32>
    %48 = vector.broadcast %47 : vector<1x128xf32> to vector<32x128xf32>
    %49 = arith.subf %41, %48 : vector<32x128xf32>
    %50 = arith.mulf %49, %49 : vector<32x128xf32>
    %cst_22 = arith.constant dense<0.000000e+00> : vector<128xf32>
    %51 = vector.multi_reduction <add>, %50, %cst_22 [0] : vector<32x128xf32> to vector<128xf32>
    %52 = vector.shape_cast %51 : vector<128xf32> to vector<1x128xf32>
    %cst_23 = arith.constant 3.125000e-02 : f32
    %53 = vector.broadcast %cst_23 : f32 to vector<1x128xf32>
    %54 = arith.mulf %52, %53 : vector<1x128xf32>
    %cst_24 = arith.constant 9.99999974E-6 : f32
    %55 = vector.broadcast %cst_24 : f32 to vector<1x128xf32>
    %56 = arith.addf %54, %55 : vector<1x128xf32>
    %57 = math.rsqrt %56 : vector<1x128xf32>
    %58 = vector.broadcast %57 : vector<1x128xf32> to vector<32x128xf32>
    %59 = arith.mulf %49, %58 : vector<32x128xf32>
    %60 = vector.broadcast %42 : vector<1x128xf32> to vector<32x128xf32>
    %61 = arith.mulf %60, %59 : vector<32x128xf32>
    %62 = vector.broadcast %43 : vector<1x128xf32> to vector<32x128xf32>
    %63 = arith.addf %61, %62 : vector<32x128xf32>
    %cst_25 = arith.constant 0.000000e+00 : f32
    %64 = vector.broadcast %cst_25 : f32 to vector<32x128xf32>
    %65 = arith.maximumf %63, %64 : vector<32x128xf32>
    %c0_26 = arith.constant 0 : index
    %c0_27 = arith.constant 0 : index
    %66 = vector.load %arg4[%c0_26, %c0_27] : memref<72x32xbf16, #tpu.memory_space<vmem>>, vector<72x32xbf16>
    %67 = arith.extf %66 : vector<72x32xbf16> to vector<72x32xf32>
    %cst_28 = arith.constant dense<0.000000e+00> : vector<72x128xf32>
    %68 = tpu.matmul %67, %65, %cst_28 {dimension_numbers = #tpu.dot_dimension_numbers<[1], [0], [0], [1], [0, 0, 1, 1], [], []>} : vector<72x32xf32>, vector<32x128xf32>, vector<72x128xf32> -> vector<72x128xf32>
    %69 = vector.extract_strided_slice %68 {offsets = [0, 0], sizes = [8, 128], strides = [1, 1]} : vector<72x128xf32> to vector<8x128xf32>
    %70 = vector.extract_strided_slice %68 {offsets = [8, 0], sizes = [8, 128], strides = [1, 1]} : vector<72x128xf32> to vector<8x128xf32>
    %71 = vector.extract_strided_slice %68 {offsets = [16, 0], sizes = [8, 128], strides = [1, 1]} : vector<72x128xf32> to vector<8x128xf32>
    %72 = vector.extract_strided_slice %68 {offsets = [24, 0], sizes = [8, 128], strides = [1, 1]} : vector<72x128xf32> to vector<8x128xf32>
    %73 = vector.extract_strided_slice %68 {offsets = [32, 0], sizes = [8, 128], strides = [1, 1]} : vector<72x128xf32> to vector<8x128xf32>
    %74 = vector.extract_strided_slice %68 {offsets = [40, 0], sizes = [8, 128], strides = [1, 1]} : vector<72x128xf32> to vector<8x128xf32>
    %75 = vector.extract_strided_slice %68 {offsets = [48, 0], sizes = [8, 128], strides = [1, 1]} : vector<72x128xf32> to vector<8x128xf32>
    %76 = vector.extract_strided_slice %68 {offsets = [56, 0], sizes = [8, 128], strides = [1, 1]} : vector<72x128xf32> to vector<8x128xf32>
    %77 = vector.extract_strided_slice %68 {offsets = [64, 0], sizes = [8, 128], strides = [1, 1]} : vector<72x128xf32> to vector<8x128xf32>
    %78 = tpu.concatenate %69, %70, %71, %72, %73, %74, %75, %76, %77 in 1 : vector<8x128xf32>, vector<8x128xf32>, vector<8x128xf32>, vector<8x128xf32>, vector<8x128xf32>, vector<8x128xf32>, vector<8x128xf32>, vector<8x128xf32>, vector<8x128xf32> -> vector<8x1152xf32>
    %c0_29 = arith.constant 0 : index
    %c0_30 = arith.constant 0 : index
    %79 = vector.load %arg5[%c0_29, %c0_30] : memref<1152x128xf32, #tpu.memory_space<vmem>>, vector<1152x128xf32>
    %cst_31 = arith.constant dense<0.000000e+00> : vector<8x128xf32>
    %80 = tpu.matmul %78, %79, %cst_31 {dimension_numbers = #tpu.dot_dimension_numbers<[1], [0], [0], [1], [0, 0, 1, 1], [], []>} : vector<8x1152xf32>, vector<1152x128xf32>, vector<8x128xf32> -> vector<8x128xf32>
    %c4 = arith.constant 4 : index
    %c0_32 = arith.constant 0 : index
    %81 = vector.load %arg8[%c4, %c0_32] : memref<8x128xf32, #tpu.memory_space<vmem>>, vector<1x128xf32>
    %c5 = arith.constant 5 : index
    %c0_33 = arith.constant 0 : index
    %82 = vector.load %arg8[%c5, %c0_33] : memref<8x128xf32, #tpu.memory_space<vmem>>, vector<1x128xf32>
    %cst_34 = arith.constant dense<0.000000e+00> : vector<128xf32>
    %83 = vector.multi_reduction <add>, %80, %cst_34 [0] : vector<8x128xf32> to vector<128xf32>
    %84 = vector.shape_cast %83 : vector<128xf32> to vector<1x128xf32>
    %cst_35 = arith.constant 1.250000e-01 : f32
    %85 = vector.broadcast %cst_35 : f32 to vector<1x128xf32>
    %86 = arith.mulf %84, %85 : vector<1x128xf32>
    %87 = vector.broadcast %86 : vector<1x128xf32> to vector<8x128xf32>
    %88 = arith.subf %80, %87 : vector<8x128xf32>
    %89 = arith.mulf %88, %88 : vector<8x128xf32>
    %cst_36 = arith.constant dense<0.000000e+00> : vector<128xf32>
    %90 = vector.multi_reduction <add>, %89, %cst_36 [0] : vector<8x128xf32> to vector<128xf32>
    %91 = vector.shape_cast %90 : vector<128xf32> to vector<1x128xf32>
    %cst_37 = arith.constant 1.250000e-01 : f32
    %92 = vector.broadcast %cst_37 : f32 to vector<1x128xf32>
    %93 = arith.mulf %91, %92 : vector<1x128xf32>
    %cst_38 = arith.constant 9.99999974E-6 : f32
    %94 = vector.broadcast %cst_38 : f32 to vector<1x128xf32>
    %95 = arith.addf %93, %94 : vector<1x128xf32>
    %96 = math.rsqrt %95 : vector<1x128xf32>
    %97 = vector.broadcast %96 : vector<1x128xf32> to vector<8x128xf32>
    %98 = arith.mulf %88, %97 : vector<8x128xf32>
    %99 = vector.broadcast %81 : vector<1x128xf32> to vector<8x128xf32>
    %100 = arith.mulf %99, %98 : vector<8x128xf32>
    %101 = vector.broadcast %82 : vector<1x128xf32> to vector<8x128xf32>
    %102 = arith.addf %100, %101 : vector<8x128xf32>
    %c0_39 = arith.constant 0 : index
    %c0_40 = arith.constant 0 : index
    %103 = vector.load %arg6[%c0_39, %c0_40] : memref<8x8xf32, #tpu.memory_space<vmem>>, vector<8x8xf32>
    %cst_41 = arith.constant dense<0.000000e+00> : vector<8x128xf32>
    %104 = tpu.matmul %103, %102, %cst_41 {dimension_numbers = #tpu.dot_dimension_numbers<[1], [0], [0], [1], [0, 0, 1, 1], [], []>} : vector<8x8xf32>, vector<8x128xf32>, vector<8x128xf32> -> vector<8x128xf32>
    %c0_42 = arith.constant 0 : index
    %c0_43 = arith.constant 0 : index
    %105 = vector.load %arg7[%c0_42, %c0_43] : memref<128x128xf32, #tpu.memory_space<vmem>>, vector<128x128xf32>
    %cst_44 = arith.constant dense<0.000000e+00> : vector<8x128xf32>
    %106 = tpu.matmul %104, %105, %cst_44 {dimension_numbers = #tpu.dot_dimension_numbers<[1], [0], [0], [1], [0, 0, 1, 1], [], []>} : vector<8x128xf32>, vector<128x128xf32>, vector<8x128xf32> -> vector<8x128xf32>
    %c6 = arith.constant 6 : index
    %c0_45 = arith.constant 0 : index
    %107 = vector.load %arg8[%c6, %c0_45] : memref<8x128xf32, #tpu.memory_space<vmem>>, vector<1x128xf32>
    %108 = vector.broadcast %107 : vector<1x128xf32> to vector<8x128xf32>
    %109 = arith.addf %106, %108 : vector<8x128xf32>
    %c0_46 = arith.constant 0 : index
    %c0_47 = arith.constant 0 : index
    %110 = vector.load %arg9[%c0_46, %c0_47] : memref<8x128xf32, #tpu.memory_space<vmem>>, vector<8x128xf32>
    tpu.vector_store %arg9[%c0_46, %c0_47], %109 {strides = array<i32>} : memref<8x128xf32, #tpu.memory_space<vmem>>, vector<8x128xf32>,
    return
  }
}

</mosaic_0001>

<llo_original>
// kernel: layer3_forward.1
$region0: #{layer3_forward.1}
  #allocation0 [shape = 'u32[]', space=smem, size = 0x4, offset = 0x4, fixed_abs, tag = 'smem constant byte address 0x4 - core index']
  #allocation1 [shape = 'u32[144,128]{1,0:T(1,128)}', space=vmem, size = 0x12000, scoped, tag = 'internal scratch']
  %s0 = inlined_call_operand.vmem [shape: f32[128,32], index: 0, kind: input, shape index: {}]
  %s1 = inlined_call_operand.vmem [shape: f32[32,128], index: 1, kind: input, shape index: {}]
  %s2 = inlined_call_operand.vmem [shape: bf16[288,128], index: 2, kind: input, shape index: {}]
  %s3 = inlined_call_operand.vmem [shape: f32[1152,128], index: 3, kind: input, shape index: {}]
  %s4 = inlined_call_operand.vmem [shape: bf16[72,32], index: 4, kind: input, shape index: {}]
  %s5 = inlined_call_operand.vmem [shape: f32[1152,128], index: 5, kind: input, shape index: {}]
  %s6 = inlined_call_operand.vmem [shape: f32[8,8], index: 6, kind: input, shape index: {}]
  %s7 = inlined_call_operand.vmem [shape: f32[128,128], index: 7, kind: input, shape index: {}]
  %s8 = inlined_call_operand.vmem [shape: f32[8,128], index: 8, kind: input, shape index: {}]
  %s9 = inlined_call_operand.vmem [shape: f32[8,128], index: 9, kind: output, shape index: {}]
  %s10 = sld [smem:[#allocation0]]
  $region46: #{layer3_forward.1} parent=0
    _
  %s12 = ssub.s32 1, %s10
  %s13 = scalar_select 0, %s12, %s10
  // Predicated region
  $region2: #{layer3_forward.1} parent=0 // pred_check
    _
  $region3: #{layer3_forward.1} parent=0 // pred_check_branch
    %15 = sbr.rel (0) target = $region5
  $region4: #{layer3_forward.1} parent=0 // pred_region
    _
  $region5: #{layer3_forward.1} parent=0 // pred_fallthru
    _
  // Predicated region
  $region6: #{layer3_forward.1} parent=0 // pred_check
    _
  $region7: #{layer3_forward.1} parent=0 // pred_check_branch
    %17 = sbr.rel (0) target = $region9
  $region8: #{layer3_forward.1} parent=0 // pred_region
    _
  $region9: #{layer3_forward.1} parent=0 // pred_fallthru
    _
  // Predicated region
  $region10: #{layer3_forward.1} parent=0 // pred_check
    _
  $region11: #{layer3_forward.1} parent=0 // pred_check_branch
    %19 = sbr.rel (0) target = $region13
  $region12: #{layer3_forward.1} parent=0 // pred_region
    _
  $region13: #{layer3_forward.1} parent=0 // pred_fallthru
    _
  // Predicated region
  $region14: #{layer3_forward.1} parent=0 // pred_check
    _
  $region15: #{layer3_forward.1} parent=0 // pred_check_branch
    %21 = sbr.rel (0) target = $region17
  $region16: #{layer3_forward.1} parent=0 // pred_region
    _
  $region17: #{layer3_forward.1} parent=0 // pred_fallthru
    _
  // Predicated region
  $region18: #{layer3_forward.1} parent=0 // pred_check
    _
  $region19: #{layer3_forward.1} parent=0 // pred_check_branch
    %23 = sbr.rel (0) target = $region21
  $region20: #{layer3_forward.1} parent=0 // pred_region
    _
  $region21: #{layer3_forward.1} parent=0 // pred_fallthru
    _
  // Predicated region
  $region22: #{layer3_forward.1} parent=0 // pred_check
    _
  $region23: #{layer3_forward.1} parent=0 // pred_check_branch
    %25 = sbr.rel (0) target = $region25
  $region24: #{layer3_forward.1} parent=0 // pred_region
    _
  $region25: #{layer3_forward.1} parent=0 // pred_fallthru
    _
  // Predicated region
  $region26: #{layer3_forward.1} parent=0 // pred_check
    _
  $region27: #{layer3_forward.1} parent=0 // pred_check_branch
    %27 = sbr.rel (0) target = $region29
  $region28: #{layer3_forward.1} parent=0 // pred_region
    _
  $region29: #{layer3_forward.1} parent=0 // pred_fallthru
    _
  // Predicated region
  $region30: #{layer3_forward.1} parent=0 // pred_check
    _
  $region31: #{layer3_forward.1} parent=0 // pred_check_branch
    %29 = sbr.rel (0) target = $region33
  $region32: #{layer3_forward.1} parent=0 // pred_region
    _
  $region33: #{layer3_forward.1} parent=0 // pred_fallthru
    _
  // Predicated region
  $region34: #{layer3_forward.1} parent=0 // pred_check
    _
  $region35: #{layer3_forward.1} parent=0 // pred_check_branch
    %31 = sbr.rel (0) target = $region37
  $region36: #{layer3_forward.1} parent=0 // pred_region
    _
  $region37: #{layer3_forward.1} parent=0 // pred_fallthru
    _
  %v32 = vld [vmem:[%s0] sm:$0xff]
  %v33 = vld [vmem:[%s0 + $0x8] sm:$0xff]
  %v34 = vld [vmem:[%s0 + $0x10] sm:$0xff]
  %v35 = vld [vmem:[%s0 + $0x18] sm:$0xff]
  %v36 = vld [vmem:[%s0 + $0x20] sm:$0xff]
  %v37 = vld [vmem:[%s0 + $0x28] sm:$0xff]
  %v38 = vld [vmem:[%s0 + $0x30] sm:$0xff]
  %v39 = vld [vmem:[%s0 + $0x38] sm:$0xff]
  %v40 = vld [vmem:[%s0 + $0x40] sm:$0xff]
  %v41 = vld [vmem:[%s0 + $0x48] sm:$0xff]
  %v42 = vld [vmem:[%s0 + $0x50] sm:$0xff]
  %v43 = vld [vmem:[%s0 + $0x58] sm:$0xff]
  %v44 = vld [vmem:[%s0 + $0x60] sm:$0xff]
  %v45 = vld [vmem:[%s0 + $0x68] sm:$0xff]
  %v46 = vld [vmem:[%s0 + $0x70] sm:$0xff]
  %v47 = vld [vmem:[%s0 + $0x78] sm:$0xff]
  %v48 = vld [vmem:[%s1] sm:$0xff]
  %v49 = vld [vmem:[%s1 + $0x8] sm:$0xff]
  %v50 = vld [vmem:[%s1 + $0x10] sm:$0xff]
  %v51 = vld [vmem:[%s1 + $0x18] sm:$0xff]
  %vm52 = vcmask 261120
  %v54 = vsel %vm52, %v32, 0
  %v57 = vsel %vm52, %v33, 0
  %v60 = vsel %vm52, %v34, 0
  %v63 = vsel %vm52, %v35, 0
  %v66 = vsel %vm52, %v36, 0
  %v69 = vsel %vm52, %v37, 0
  %v72 = vsel %vm52, %v38, 0
  %v75 = vsel %vm52, %v39, 0
  %v78 = vsel %vm52, %v40, 0
  %v81 = vsel %vm52, %v41, 0
  %v84 = vsel %vm52, %v42, 0
  %v87 = vsel %vm52, %v43, 0
  %v90 = vsel %vm52, %v44, 0
  %v93 = vsel %vm52, %v45, 0
  %v96 = vsel %vm52, %v46, 0
  %v99 = vsel %vm52, %v47, 0
  %101 = vmatprep.subr.mxu0 0.0
  %102 = vmatpush1.msra.mxu0 0.0
  %103 = vmatprep.subr.mxu0 0.0
  %104 = vmatpush1.msra.mxu0 0.0
  %105 = vmatprep.subr.mxu0 0.0
  %106 = vmatpush1.msra.mxu0 0.0
  %107 = vmatprep.subr.mxu0 0.0
  %108 = vmatpush1.msra.mxu0 0.0
  %109 = vmatprep.subr.mxu0 0.0
  %110 = vmatpush1.msra.mxu0 0.0
  %111 = vmatprep.subr.mxu0 0.0
  %112 = vmatpush1.msra.mxu0 0.0
  %113 = vmatprep.subr.mxu0 0.0
  %114 = vmatpush1.msra.mxu0 0.0
  %115 = vmatprep.subr.mxu0 0.0
  %116 = vmatpush1.msra.mxu0 0.0
  %117 = vmatprep.subr.mxu0 0.0
  %118 = vmatpush1.msra.mxu0 0.0
  %119 = vmatprep.subr.mxu0 0.0
  %120 = vmatpush1.msra.mxu0 0.0
  %121 = vmatprep.subr.mxu0 0.0
  %122 = vmatpush1.msra.mxu0 0.0
  %123 = vmatprep.subr.mxu0 0.0
  %124 = vmatpush1.msra.mxu0 0.0
  %125 = vmatprep.subr.mxu0 0.0
  %126 = vmatpush1.msra.mxu0 %v51
  %127 = vmatprep.subr.mxu0 0.0
  %128 = vmatpush1.msra.mxu0 %v50
  %129 = vmatprep.subr.mxu0 0.0
  %130 = vmatpush1.msra.mxu0 %v49
  %131 = vmatprep.subr.mxu0 0.0
  %132 = vmatpush1.msra.mxu0 %v48
  %133 = vmatprep.subr.mxu0 0.0
  %134 = vmatpush2.msra.mxu0 0.0
  %135 = vmatprep.subr.mxu0 0.0
  %136 = vmatpush2.msra.mxu0 0.0
  %137 = vmatprep.subr.mxu0 0.0
  %138 = vmatpush2.msra.mxu0 0.0
  %139 = vmatprep.subr.mxu0 0.0
  %140 = vmatpush2.msra.mxu0 0.0
  %141 = vmatprep.subr.mxu0 0.0
  %142 = vmatpush2.msra.mxu0 0.0
  %143 = vmatprep.subr.mxu0 0.0
  %144 = vmatpush2.msra.mxu0 0.0
  %145 = vmatprep.subr.mxu0 0.0
  %146 = vmatpush2.msra.mxu0 0.0
  %147 = vmatprep.subr.mxu0 0.0
  %148 = vmatpush2.msra.mxu0 0.0
  %149 = vmatprep.subr.mxu0 0.0
  %150 = vmatpush2.msra.mxu0 0.0
  %151 = vmatprep.subr.mxu0 0.0
  %152 = vmatpush2.msra.mxu0 0.0
  %153 = vmatprep.subr.mxu0 0.0
  %154 = vmatpush2.msra.mxu0 0.0
  %155 = vmatprep.subr.mxu0 0.0
  %156 = vmatpush2.msra.mxu0 0.0
  %157 = vmatprep.subr.mxu0 0.0
  %158 = vmatpush2.msra.mxu0 0.0
  %159 = vmatprep.subr.mxu0 0.0
  %160 = vmatpush2.msra.mxu0 0.0
  %161 = vmatprep.subr.mxu0 0.0
  %162 = vmatpush2.msra.mxu0 0.0
  %163 = vmatprep.subr.mxu0 0.0
  %164 = vmatpush2.msra.mxu0 0.0
  %165 = vmatprep.mubr.f32.mxu0 0.0
  %166 = vmatmul.mubr.f32.gmra.mxu0 %v54
  %v167 = vpop.f32.mrf.mxu0
  %v168 = vadd.f32 0.0, %v167
  %v169 = vpop.f32.mrf.mxu0
  %170 = vmatprep.mubr.f32.mxu0 0.0
  %171 = vmatmul.mubr.f32.gmra.mxu0 %v57
  %v172 = vpop.f32.mrf.mxu0
  %v173 = vadd.f32 0.0, %v172
  %v174 = vpop.f32.mrf.mxu0
  %175 = vmatprep.mubr.f32.mxu0 0.0
  %176 = vmatmul.mubr.f32.gmra.mxu0 %v60
  %v177 = vpop.f32.mrf.mxu0
  %v178 = vadd.f32 0.0, %v177
  %v179 = vpop.f32.mrf.mxu0
  %180 = vmatprep.mubr.f32.mxu0 0.0
  %181 = vmatmul.mubr.f32.gmra.mxu0 %v63
  %v182 = vpop.f32.mrf.mxu0
  %v183 = vadd.f32 0.0, %v182
  %v184 = vpop.f32.mrf.mxu0
  %185 = vmatprep.mubr.f32.mxu0 0.0
  %186 = vmatmul.mubr.f32.gmra.mxu0 %v66
  %v187 = vpop.f32.mrf.mxu0
  %v188 = vadd.f32 0.0, %v187
  %v189 = vpop.f32.mrf.mxu0
  %190 = vmatprep.mubr.f32.mxu0 0.0
  %191 = vmatmul.mubr.f32.gmra.mxu0 %v69
  %v192 = vpop.f32.mrf.mxu0
  %v193 = vadd.f32 0.0, %v192
  %v194 = vpop.f32.mrf.mxu0
  %195 = vmatprep.mubr.f32.mxu0 0.0
  %196 = vmatmul.mubr.f32.gmra.mxu0 %v72
  %v197 = vpop.f32.mrf.mxu0
  %v198 = vadd.f32 0.0, %v197
  %v199 = vpop.f32.mrf.mxu0
  %200 = vmatprep.mubr.f32.mxu0 0.0
  %201 = vmatmul.mubr.f32.gmra.mxu0 %v75
  %v202 = vpop.f32.mrf.mxu0
  %v203 = vadd.f32 0.0, %v202
  %v204 = vpop.f32.mrf.mxu0
  %205 = vmatprep.mubr.f32.mxu0 0.0
  %206 = vmatmul.mubr.f32.gmra.mxu0 %v78
  %v207 = vpop.f32.mrf.mxu0
  %v208 = vadd.f32 0.0, %v207
  %v209 = vpop.f32.mrf.mxu0
  %210 = vmatprep.mubr.f32.mxu0 0.0
  %211 = vmatmul.mubr.f32.gmra.mxu0 %v81
  %v212 = vpop.f32.mrf.mxu0
  %v213 = vadd.f32 0.0, %v212
  %v214 = vpop.f32.mrf.mxu0
  %215 = vmatprep.mubr.f32.mxu0 0.0
  %216 = vmatmul.mubr.f32.gmra.mxu0 %v84
  %v217 = vpop.f32.mrf.mxu0
  %v218 = vadd.f32 0.0, %v217
  %v219 = vpop.f32.mrf.mxu0
  %220 = vmatprep.mubr.f32.mxu0 0.0
  %221 = vmatmul.mubr.f32.gmra.mxu0 %v87
  %v222 = vpop.f32.mrf.mxu0
  %v223 = vadd.f32 0.0, %v222
  %v224 = vpop.f32.mrf.mxu0
  %225 = vmatprep.mubr.f32.mxu0 0.0
  %226 = vmatmul.mubr.f32.gmra.mxu0 %v90
  %v227 = vpop.f32.mrf.mxu0
  %v228 = vadd.f32 0.0, %v227
  %v229 = vpop.f32.mrf.mxu0
  %230 = vmatprep.mubr.f32.mxu0 0.0
  %231 = vmatmul.mubr.f32.gmra.mxu0 %v93
  %v232 = vpop.f32.mrf.mxu0
  %v233 = vadd.f32 0.0, %v232
  %v234 = vpop.f32.mrf.mxu0
  %235 = vmatprep.mubr.f32.mxu0 0.0
  %236 = vmatmul.mubr.f32.gmra.mxu0 %v96
  %v237 = vpop.f32.mrf.mxu0
  %v238 = vadd.f32 0.0, %v237
  %v239 = vpop.f32.mrf.mxu0
  %240 = vmatprep.mubr.f32.mxu0 0.0
  %241 = vmatmul.mubr.f32.gmra.mxu0 %v99
  %v242 = vpop.f32.mrf.mxu0
  %v243 = vadd.f32 0.0, %v242
  %v244 = vpop.f32.mrf.mxu0
  %245 = vdwg.mxu0
  %v246 = vld [vmem:[%s8] sm:$0x1]
  %v247 = vld [vmem:[%s8 + $0x1] sm:$0x1]
  %v248 = vadd.f32 %v168, %v173
  %v249 = vadd.f32 %v248, %v178
  %v250 = vadd.f32 %v249, %v183
  %v251 = vadd.f32 %v250, %v188
  %v252 = vadd.f32 %v251, %v193
  %v253 = vadd.f32 %v252, %v198
  %v254 = vadd.f32 %v253, %v203
  %v255 = vadd.f32 %v254, %v208
  %v256 = vadd.f32 %v255, %v213
  %v257 = vadd.f32 %v256, %v218
  %v258 = vadd.f32 %v257, %v223
  %v259 = vadd.f32 %v258, %v228
  %v260 = vadd.f32 %v259, %v233
  %v261 = vadd.f32 %v260, %v238
  %v262 = vadd.f32 %v261, %v243
  %v263 = vrot.slane %v262, 4
  %v264 = vadd.f32 %v262, %v263
  %v265 = vrot.slane %v264, 2
  %v266 = vadd.f32 %v264, %v265
  %v267 = vrot.slane %v266, 1
  %v268 = vadd.f32 %v266, %v267
  %v269 = vmul.f32 %v268, 0.0078125
  %v270 = vsub.f32 %v168, %v269
  %v271 = vsub.f32 %v173, %v269
  %v272 = vsub.f32 %v178, %v269
  %v273 = vsub.f32 %v183, %v269
  %v274 = vsub.f32 %v188, %v269
  %v275 = vsub.f32 %v193, %v269
  %v276 = vsub.f32 %v198, %v269
  %v277 = vsub.f32 %v203, %v269
  %v278 = vsub.f32 %v208, %v269
  %v279 = vsub.f32 %v213, %v269
  %v280 = vsub.f32 %v218, %v269
  %v281 = vsub.f32 %v223, %v269
  %v282 = vsub.f32 %v228, %v269
  %v283 = vsub.f32 %v233, %v269
  %v284 = vsub.f32 %v238, %v269
  %v285 = vsub.f32 %v243, %v269
  %v286 = vmul.f32 %v270, %v270
  %v287 = vmul.f32 %v271, %v271
  %v288 = vmul.f32 %v272, %v272
  %v289 = vmul.f32 %v273, %v273
  %v290 = vmul.f32 %v274, %v274
  %v291 = vmul.f32 %v275, %v275
  %v292 = vmul.f32 %v276, %v276
  %v293 = vmul.f32 %v277, %v277
  %v294 = vmul.f32 %v278, %v278
  %v295 = vmul.f32 %v279, %v279
  %v296 = vmul.f32 %v280, %v280
  %v297 = vmul.f32 %v281, %v281
  %v298 = vmul.f32 %v282, %v282
  %v299 = vmul.f32 %v283, %v283
  %v300 = vmul.f32 %v284, %v284
  %v301 = vmul.f32 %v285, %v285
  %v302 = vadd.f32 %v286, %v287
  %v303 = vadd.f32 %v302, %v288
  %v304 = vadd.f32 %v303, %v289
  %v305 = vadd.f32 %v304, %v290
  %v306 = vadd.f32 %v305, %v291
  %v307 = vadd.f32 %v306, %v292
  %v308 = vadd.f32 %v307, %v293
  %v309 = vadd.f32 %v308, %v294
  %v310 = vadd.f32 %v309, %v295
  %v311 = vadd.f32 %v310, %v296
  %v312 = vadd.f32 %v311, %v297
  %v313 = vadd.f32 %v312, %v298
  %v314 = vadd.f32 %v313, %v299
  %v315 = vadd.f32 %v314, %v300
  %v316 = vadd.f32 %v315, %v301
  %v317 = vrot.slane %v316, 4
  %v318 = vadd.f32 %v316, %v317
  %v319 = vrot.slane %v318, 2
  %v320 = vadd.f32 %v318, %v319
  %v321 = vrot.slane %v320, 1
  %v322 = vadd.f32 %v320, %v321
  %v323 = vmul.f32 %v322, 0.0078125
  %v324 = vadd.f32 %v323, 1e-05
  %v325 = vrsqrt.pop %v324
  %v326 = vmul.f32 %v270, %v325
  %v327 = vmul.f32 %v271, %v325
  %v328 = vmul.f32 %v272, %v325
  %v329 = vmul.f32 %v273, %v325
  %v330 = vmul.f32 %v274, %v325
  %v331 = vmul.f32 %v275, %v325
  %v332 = vmul.f32 %v276, %v325
  %v333 = vmul.f32 %v277, %v325
  %v334 = vmul.f32 %v278, %v325
  %v335 = vmul.f32 %v279, %v325
  %v336 = vmul.f32 %v280, %v325
  %v337 = vmul.f32 %v281, %v325
  %v338 = vmul.f32 %v282, %v325
  %v339 = vmul.f32 %v283, %v325
  %v340 = vmul.f32 %v284, %v325
  %v341 = vmul.f32 %v285, %v325
  %v342 = vlaneseq
  %v343 = vshrl.u32 %v342, 7
  %v344 = vsub.s32 0, %v343
  %v345 = vrot.slane %v246, %v344
  %v346 = vmul.f32 %v345, %v326
  %v347 = vmul.f32 %v345, %v327
  %v348 = vmul.f32 %v345, %v328
  %v349 = vmul.f32 %v345, %v329
  %v350 = vmul.f32 %v345, %v330
  %v351 = vmul.f32 %v345, %v331
  %v352 = vmul.f32 %v345, %v332
  %v353 = vmul.f32 %v345, %v333
  %v354 = vmul.f32 %v345, %v334
  %v355 = vmul.f32 %v345, %v335
  %v356 = vmul.f32 %v345, %v336
  %v357 = vmul.f32 %v345, %v337
  %v358 = vmul.f32 %v345, %v338
  %v359 = vmul.f32 %v345, %v339
  %v360 = vmul.f32 %v345, %v340
  %v361 = vmul.f32 %v345, %v341
  %v362 = vlaneseq
  %v363 = vshrl.u32 %v362, 7
  %v364 = vsub.s32 0, %v363
  %v365 = vrot.slane %v247, %v364
  %v366 = vadd.f32 %v346, %v365
  %v367 = vadd.f32 %v347, %v365
  %v368 = vadd.f32 %v348, %v365
  %v369 = vadd.f32 %v349, %v365
  %v370 = vadd.f32 %v350, %v365
  %v371 = vadd.f32 %v351, %v365
  %v372 = vadd.f32 %v352, %v365
  %v373 = vadd.f32 %v353, %v365
  %v374 = vadd.f32 %v354, %v365
  %v375 = vadd.f32 %v355, %v365
  %v376 = vadd.f32 %v356, %v365
  %v377 = vadd.f32 %v357, %v365
  %v378 = vadd.f32 %v358, %v365
  %v379 = vadd.f32 %v359, %v365
  %v380 = vadd.f32 %v360, %v365
  %v381 = vadd.f32 %v361, %v365
  %v382 = vmax.f32 %v366, 0.0
  %v383 = vmax.f32 %v367, 0.0
  %v384 = vmax.f32 %v368, 0.0
  %v385 = vmax.f32 %v369, 0.0
  %v386 = vmax.f32 %v370, 0.0
  %v387 = vmax.f32 %v371, 0.0
  %v388 = vmax.f32 %v372, 0.0
  %v389 = vmax.f32 %v373, 0.0
  %v390 = vmax.f32 %v374, 0.0
  %v391 = vmax.f32 %v375, 0.0
  %v392 = vmax.f32 %v376, 0.0
  %v393 = vmax.f32 %v377, 0.0
  %v394 = vmax.f32 %v378, 0.0
  %v395 = vmax.f32 %v379, 0.0
  %v396 = vmax.f32 %v380, 0.0
  %v397 = vmax.f32 %v381, 0.0
  %v398 = vld [vmem:[%s2] sm:$0xf]
  %v399 = vld [vmem:[%s2 + $0x4] sm:$0xf]
  %v400 = vld [vmem:[%s2 + $0x8] sm:$0xf]
  %v401 = vld [vmem:[%s2 + $0xc] sm:$0xf]
  %v402 = vld [vmem:[%s2 + $0x10] sm:$0xf]
  %v403 = vld [vmem:[%s2 + $0x14] sm:$0xf]
  %v404 = vld [vmem:[%s2 + $0x18] sm:$0xf]
  %v405 = vld [vmem:[%s2 + $0x1c] sm:$0xf]
  %v406 = vld [vmem:[%s2 + $0x20] sm:$0xf]
  %v407 = vld [vmem:[%s2 + $0x24] sm:$0xf]
  %v408 = vld [vmem:[%s2 + $0x28] sm:$0xf]
  %v409 = vld [vmem:[%s2 + $0x2c] sm:$0xf]
  %v410 = vld [vmem:[%s2 + $0x30] sm:$0xf]
  %v411 = vld [vmem:[%s2 + $0x34] sm:$0xf]
  %v412 = vld [vmem:[%s2 + $0x38] sm:$0xf]
  %v413 = vld [vmem:[%s2 + $0x3c] sm:$0xf]
  %v414 = vld [vmem:[%s2 + $0x40] sm:$0xf]
  %v415 = vld [vmem:[%s2 + $0x44] sm:$0xf]
  %v416 = vld [vmem:[%s2 + $0x48] sm:$0xf]
  %v417 = vld [vmem:[%s2 + $0x4c] sm:$0xf]
  %v418 = vld [vmem:[%s2 + $0x50] sm:$0xf]
  %v419 = vld [vmem:[%s2 + $0x54] sm:$0xf]
  %v420 = vld [vmem:[%s2 + $0x58] sm:$0xf]
  %v421 = vld [vmem:[%s2 + $0x5c] sm:$0xf]
  %v422 = vld [vmem:[%s2 + $0x60] sm:$0xf]
  %v423 = vld [vmem:[%s2 + $0x64] sm:$0xf]
  %v424 = vld [vmem:[%s2 + $0x68] sm:$0xf]
  %v425 = vld [vmem:[%s2 + $0x6c] sm:$0xf]
  %v426 = vld [vmem:[%s2 + $0x70] sm:$0xf]
  %v427 = vld [vmem:[%s2 + $0x74] sm:$0xf]
  %v428 = vld [vmem:[%s2 + $0x78] sm:$0xf]
  %v429 = vld [vmem:[%s2 + $0x7c] sm:$0xf]
  %v430 = vld [vmem:[%s2 + $0x80] sm:$0xf]
  %v431 = vld [vmem:[%s2 + $0x84] sm:$0xf]
  %v432 = vld [vmem:[%s2 + $0x88] sm:$0xf]
  %v433 = vld [vmem:[%s2 + $0x8c] sm:$0xf]
  %v434 = vunpack.c.l.bf16 %v398
  %v435 = vunpack.c.l.bf16 %v399
  %v436 = vunpack.c.l.bf16 %v400
  %v437 = vunpack.c.l.bf16 %v401
  %v438 = vunpack.c.l.bf16 %v402
  %v439 = vunpack.c.l.bf16 %v403
  %v440 = vunpack.c.l.bf16 %v404
  %v441 = vunpack.c.l.bf16 %v405
  %v442 = vunpack.c.l.bf16 %v406
  %v443 = vunpack.c.l.bf16 %v407
  %v444 = vunpack.c.l.bf16 %v408
  %v445 = vunpack.c.l.bf16 %v409
  %v446 = vunpack.c.l.bf16 %v410
  %v447 = vunpack.c.l.bf16 %v411
  %v448 = vunpack.c.l.bf16 %v412
  %v449 = vunpack.c.l.bf16 %v413
  %v450 = vunpack.c.l.bf16 %v414
  %v451 = vunpack.c.l.bf16 %v415
  %v452 = vunpack.c.l.bf16 %v416
  %v453 = vunpack.c.l.bf16 %v417
  %v454 = vunpack.c.l.bf16 %v418
  %v455 = vunpack.c.l.bf16 %v419
  %v456 = vunpack.c.l.bf16 %v420
  %v457 = vunpack.c.l.bf16 %v421
  %v458 = vunpack.c.l.bf16 %v422
  %v459 = vunpack.c.l.bf16 %v423
  %v460 = vunpack.c.l.bf16 %v424
  %v461 = vunpack.c.l.bf16 %v425
  %v462 = vunpack.c.l.bf16 %v426
  %v463 = vunpack.c.l.bf16 %v427
  %v464 = vunpack.c.l.bf16 %v428
  %v465 = vunpack.c.l.bf16 %v429
  %v466 = vunpack.c.l.bf16 %v430
  %v467 = vunpack.c.l.bf16 %v431
  %v468 = vunpack.c.l.bf16 %v432
  %v469 = vunpack.c.l.bf16 %v433
  %470 = vmatprep.subr.mxu0 0.0
  %471 = vmatpush1.msra.mxu0 %v397
  %472 = vmatprep.subr.mxu0 0.0
  %473 = vmatpush1.msra.mxu0 %v396
  %474 = vmatprep.subr.mxu0 0.0
  %475 = vmatpush1.msra.mxu0 %v395
  %476 = vmatprep.subr.mxu0 0.0
  %477 = vmatpush1.msra.mxu0 %v394
  %478 = vmatprep.subr.mxu0 0.0
  %479 = vmatpush1.msra.mxu0 %v393
  %480 = vmatprep.subr.mxu0 0.0
  %481 = vmatpush1.msra.mxu0 %v392
  %482 = vmatprep.subr.mxu0 0.0
  %483 = vmatpush1.msra.mxu0 %v391
  %484 = vmatprep.subr.mxu0 0.0
  %485 = vmatpush1.msra.mxu0 %v390
  %486 = vmatprep.subr.mxu0 0.0
  %487 = vmatpush1.msra.mxu0 %v389
  %488 = vmatprep.subr.mxu0 0.0
  %489 = vmatpush1.msra.mxu0 %v388
  %490 = vmatprep.subr.mxu0 0.0
  %491 = vmatpush1.msra.mxu0 %v387
  %492 = vmatprep.subr.mxu0 0.0
  %493 = vmatpush1.msra.mxu0 %v386
  %494 = vmatprep.subr.mxu0 0.0
  %495 = vmatpush1.msra.mxu0 %v385
  %496 = vmatprep.subr.mxu0 0.0
  %497 = vmatpush1.msra.mxu0 %v384
  %498 = vmatprep.subr.mxu0 0.0
  %499 = vmatpush1.msra.mxu0 %v383
  %500 = vmatprep.subr.mxu0 0.0
  %501 = vmatpush1.msra.mxu0 %v382
  %502 = vmatprep.subr.mxu0 0.0
  %503 = vmatpush2.msra.mxu0 0.0
  %504 = vmatprep.subr.mxu0 0.0
  %505 = vmatpush2.msra.mxu0 0.0
  %506 = vmatprep.subr.mxu0 0.0
  %507 = vmatpush2.msra.mxu0 0.0
  %508 = vmatprep.subr.mxu0 0.0
  %509 = vmatpush2.msra.mxu0 0.0
  %510 = vmatprep.subr.mxu0 0.0
  %511 = vmatpush2.msra.mxu0 0.0
  %512 = vmatprep.subr.mxu0 0.0
  %513 = vmatpush2.msra.mxu0 0.0
  %514 = vmatprep.subr.mxu0 0.0
  %515 = vmatpush2.msra.mxu0 0.0
  %516 = vmatprep.subr.mxu0 0.0
  %517 = vmatpush2.msra.mxu0 0.0
  %518 = vmatprep.subr.mxu0 0.0
  %519 = vmatpush2.msra.mxu0 0.0
  %520 = vmatprep.subr.mxu0 0.0
  %521 = vmatpush2.msra.mxu0 0.0
  %522 = vmatprep.subr.mxu0 0.0
  %523 = vmatpush2.msra.mxu0 0.0
  %524 = vmatprep.subr.mxu0 0.0
  %525 = vmatpush2.msra.mxu0 0.0
  %526 = vmatprep.subr.mxu0 0.0
  %527 = vmatpush2.msra.mxu0 0.0
  %528 = vmatprep.subr.mxu0 0.0
  %529 = vmatpush2.msra.mxu0 0.0
  %530 = vmatprep.subr.mxu0 0.0
  %531 = vmatpush2.msra.mxu0 0.0
  %532 = vmatprep.subr.mxu0 0.0
  %533 = vmatpush2.msra.mxu0 0.0
  %534 = vmatprep.mubr.f32.mxu0 0.0
  %535 = vmatmul.mubr.f32.gmra.mxu0 %v434
  %v536 = vpop.f32.mrf.mxu0
  %v537 = vadd.f32 0.0, %v536
  %v538 = vpop.f32.mrf.mxu0
  %539 = vmatprep.mubr.f32.mxu0 0.0
  %540 = vmatmul.mubr.f32.gmra.mxu0 %v435
  %v541 = vpop.f32.mrf.mxu0
  %v542 = vadd.f32 0.0, %v541
  %v543 = vpop.f32.mrf.mxu0
  %544 = vmatprep.mubr.f32.mxu0 0.0
  %545 = vmatmul.mubr.f32.gmra.mxu0 %v436
  %v546 = vpop.f32.mrf.mxu0
  %v547 = vadd.f32 0.0, %v546
  %v548 = vpop.f32.mrf.mxu0
  %549 = vmatprep.mubr.f32.mxu0 0.0
  %550 = vmatmul.mubr.f32.gmra.mxu0 %v437
  %v551 = vpop.f32.mrf.mxu0
  %v552 = vadd.f32 0.0, %v551
  %v553 = vpop.f32.mrf.mxu0
  %554 = vmatprep.mubr.f32.mxu0 0.0
  %555 = vmatmul.mubr.f32.gmra.mxu0 %v438
  %v556 = vpop.f32.mrf.mxu0
  %v557 = vadd.f32 0.0, %v556
  %v558 = vpop.f32.mrf.mxu0
  %559 = vmatprep.mubr.f32.mxu0 0.0
  %560 = vmatmul.mubr.f32.gmra.mxu0 %v439
  %v561 = vpop.f32.mrf.mxu0
  %v562 = vadd.f32 0.0, %v561
  %v563 = vpop.f32.mrf.mxu0
  %564 = vmatprep.mubr.f32.mxu0 0.0
  %565 = vmatmul.mubr.f32.gmra.mxu0 %v440
  %v566 = vpop.f32.mrf.mxu0
  %v567 = vadd.f32 0.0, %v566
  %v568 = vpop.f32.mrf.mxu0
  %569 = vmatprep.mubr.f32.mxu0 0.0
  %570 = vmatmul.mubr.f32.gmra.mxu0 %v441
  %v571 = vpop.f32.mrf.mxu0
  %v572 = vadd.f32 0.0, %v571
  %v573 = vpop.f32.mrf.mxu0
  %574 = vmatprep.mubr.f32.mxu0 0.0
  %575 = vmatmul.mubr.f32.gmra.mxu0 %v442
  %v576 = vpop.f32.mrf.mxu0
  %v577 = vadd.f32 0.0, %v576
  %v578 = vpop.f32.mrf.mxu0
  %579 = vmatprep.mubr.f32.mxu0 0.0
  %580 = vmatmul.mubr.f32.gmra.mxu0 %v443
  %v581 = vpop.f32.mrf.mxu0
  %v582 = vadd.f32 0.0, %v581
  %v583 = vpop.f32.mrf.mxu0
  %584 = vmatprep.mubr.f32.mxu0 0.0
  %585 = vmatmul.mubr.f32.gmra.mxu0 %v444
  %v586 = vpop.f32.mrf.mxu0
  %v587 = vadd.f32 0.0, %v586
  %v588 = vpop.f32.mrf.mxu0
  %589 = vmatprep.mubr.f32.mxu0 0.0
  %590 = vmatmul.mubr.f32.gmra.mxu0 %v445
  %v591 = vpop.f32.mrf.mxu0
  %v592 = vadd.f32 0.0, %v591
  %v593 = vpop.f32.mrf.mxu0
  %594 = vmatprep.mubr.f32.mxu0 0.0
  %595 = vmatmul.mubr.f32.gmra.mxu0 %v446
  %v596 = vpop.f32.mrf.mxu0
  %v597 = vadd.f32 0.0, %v596
  %v598 = vpop.f32.mrf.mxu0
  %599 = vmatprep.mubr.f32.mxu0 0.0
  %600 = vmatmul.mubr.f32.gmra.mxu0 %v447
  %v601 = vpop.f32.mrf.mxu0
  %v602 = vadd.f32 0.0, %v601
  %v603 = vpop.f32.mrf.mxu0
  %604 = vmatprep.mubr.f32.mxu0 0.0
  %605 = vmatmul.mubr.f32.gmra.mxu0 %v448
  %v606 = vpop.f32.mrf.mxu0
  %v607 = vadd.f32 0.0, %v606
  %v608 = vpop.f32.mrf.mxu0
  %609 = vmatprep.mubr.f32.mxu0 0.0
  %610 = vmatmul.mubr.f32.gmra.mxu0 %v449
  %v611 = vpop.f32.mrf.mxu0
  %v612 = vadd.f32 0.0, %v611
  %v613 = vpop.f32.mrf.mxu0
  %614 = vmatprep.mubr.f32.mxu0 0.0
  %615 = vmatmul.mubr.f32.gmra.mxu0 %v450
  %v616 = vpop.f32.mrf.mxu0
  %v617 = vadd.f32 0.0, %v616
  %v618 = vpop.f32.mrf.mxu0
  %619 = vmatprep.mubr.f32.mxu0 0.0
  %620 = vmatmul.mubr.f32.gmra.mxu0 %v451
  %v621 = vpop.f32.mrf.mxu0
  %v622 = vadd.f32 0.0, %v621
  %v623 = vpop.f32.mrf.mxu0
  %624 = vmatprep.mubr.f32.mxu0 0.0
  %625 = vmatmul.mubr.f32.gmra.mxu0 %v452
  %v626 = vpop.f32.mrf.mxu0
  %v627 = vadd.f32 0.0, %v626
  %v628 = vpop.f32.mrf.mxu0
  %629 = vmatprep.mubr.f32.mxu0 0.0
  %630 = vmatmul.mubr.f32.gmra.mxu0 %v453
  %v631 = vpop.f32.mrf.mxu0
  %v632 = vadd.f32 0.0, %v631
  %v633 = vpop.f32.mrf.mxu0
  %634 = vmatprep.mubr.f32.mxu0 0.0
  %635 = vmatmul.mubr.f32.gmra.mxu0 %v454
  %v636 = vpop.f32.mrf.mxu0
  %v637 = vadd.f32 0.0, %v636
  %v638 = vpop.f32.mrf.mxu0
  %639 = vmatprep.mubr.f32.mxu0 0.0
  %640 = vmatmul.mubr.f32.gmra.mxu0 %v455
  %v641 = vpop.f32.mrf.mxu0
  %v642 = vadd.f32 0.0, %v641
  %v643 = vpop.f32.mrf.mxu0
  %644 = vmatprep.mubr.f32.mxu0 0.0
  %645 = vmatmul.mubr.f32.gmra.mxu0 %v456
  %v646 = vpop.f32.mrf.mxu0
  %v647 = vadd.f32 0.0, %v646
  %v648 = vpop.f32.mrf.mxu0
  %649 = vmatprep.mubr.f32.mxu0 0.0
  %650 = vmatmul.mubr.f32.gmra.mxu0 %v457
  %v651 = vpop.f32.mrf.mxu0
  %v652 = vadd.f32 0.0, %v651
  %v653 = vpop.f32.mrf.mxu0
  %654 = vmatprep.mubr.f32.mxu0 0.0
  %655 = vmatmul.mubr.f32.gmra.mxu0 %v458
  %v656 = vpop.f32.mrf.mxu0
  %v657 = vadd.f32 0.0, %v656
  %v658 = vpop.f32.mrf.mxu0
  %659 = vmatprep.mubr.f32.mxu0 0.0
  %660 = vmatmul.mubr.f32.gmra.mxu0 %v459
  %v661 = vpop.f32.mrf.mxu0
  %v662 = vadd.f32 0.0, %v661
  %v663 = vpop.f32.mrf.mxu0
  %664 = vmatprep.mubr.f32.mxu0 0.0
  %665 = vmatmul.mubr.f32.gmra.mxu0 %v460
  %v666 = vpop.f32.mrf.mxu0
  %v667 = vadd.f32 0.0, %v666
  %v668 = vpop.f32.mrf.mxu0
  %669 = vmatprep.mubr.f32.mxu0 0.0
  %670 = vmatmul.mubr.f32.gmra.mxu0 %v461
  %v671 = vpop.f32.mrf.mxu0
  %v672 = vadd.f32 0.0, %v671
  %v673 = vpop.f32.mrf.mxu0
  %674 = vmatprep.mubr.f32.mxu0 0.0
  %675 = vmatmul.mubr.f32.gmra.mxu0 %v462
  %v676 = vpop.f32.mrf.mxu0
  %v677 = vadd.f32 0.0, %v676
  %v678 = vpop.f32.mrf.mxu0
  %679 = vmatprep.mubr.f32.mxu0 0.0
  %680 = vmatmul.mubr.f32.gmra.mxu0 %v463
  %v681 = vpop.f32.mrf.mxu0
  %v682 = vadd.f32 0.0, %v681
  %v683 = vpop.f32.mrf.mxu0
  %684 = vmatprep.mubr.f32.mxu0 0.0
  %685 = vmatmul.mubr.f32.gmra.mxu0 %v464
  %v686 = vpop.f32.mrf.mxu0
  %v687 = vadd.f32 0.0, %v686
  %v688 = vpop.f32.mrf.mxu0
  %689 = vmatprep.mubr.f32.mxu0 0.0
  %690 = vmatmul.mubr.f32.gmra.mxu0 %v465
  %v691 = vpop.f32.mrf.mxu0
  %v692 = vadd.f32 0.0, %v691
  %v693 = vpop.f32.mrf.mxu0
  %694 = vmatprep.mubr.f32.mxu0 0.0
  %695 = vmatmul.mubr.f32.gmra.mxu0 %v466
  %v696 = vpop.f32.mrf.mxu0
  %v697 = vadd.f32 0.0, %v696
  %v698 = vpop.f32.mrf.mxu0
  %699 = vmatprep.mubr.f32.mxu0 0.0
  %700 = vmatmul.mubr.f32.gmra.mxu0 %v467
  %v701 = vpop.f32.mrf.mxu0
  %v702 = vadd.f32 0.0, %v701
  %v703 = vpop.f32.mrf.mxu0
  %704 = vmatprep.mubr.f32.mxu0 0.0
  %705 = vmatmul.mubr.f32.gmra.mxu0 %v468
  %v706 = vpop.f32.mrf.mxu0
  %v707 = vadd.f32 0.0, %v706
  %v708 = vpop.f32.mrf.mxu0
  %709 = vmatprep.mubr.f32.mxu0 0.0
  %710 = vmatmul.mubr.f32.gmra.mxu0 %v469
  %v711 = vpop.f32.mrf.mxu0
  %v712 = vadd.f32 0.0, %v711
  %v713 = vpop.f32.mrf.mxu0
  %714 = vdwg.mxu0
  %v715 = vld [vmem:[%s3] sm:$0xff]
  %v716 = vld [vmem:[%s3 + $0x8] sm:$0xff]
  %v717 = vld [vmem:[%s3 + $0x10] sm:$0xff]
  %v718 = vld [vmem:[%s3 + $0x18] sm:$0xff]
  %v719 = vld [vmem:[%s3 + $0x20] sm:$0xff]
  %v720 = vld [vmem:[%s3 + $0x28] sm:$0xff]
  %v721 = vld [vmem:[%s3 + $0x30] sm:$0xff]
  %v722 = vld [vmem:[%s3 + $0x38] sm:$0xff]
  %v723 = vld [vmem:[%s3 + $0x40] sm:$0xff]
  %v724 = vld [vmem:[%s3 + $0x48] sm:$0xff]
  %v725 = vld [vmem:[%s3 + $0x50] sm:$0xff]
  %v726 = vld [vmem:[%s3 + $0x58] sm:$0xff]
  %v727 = vld [vmem:[%s3 + $0x60] sm:$0xff]
  %v728 = vld [vmem:[%s3 + $0x68] sm:$0xff]
  %v729 = vld [vmem:[%s3 + $0x70] sm:$0xff]
  %v730 = vld [vmem:[%s3 + $0x78] sm:$0xff]
  %v731 = vld [vmem:[%s3 + $0x80] sm:$0xff]
  %v732 = vld [vmem:[%s3 + $0x88] sm:$0xff]
  %v733 = vld [vmem:[%s3 + $0x90] sm:$0xff]
  %v734 = vld [vmem:[%s3 + $0x98] sm:$0xff]
  %v735 = vld [vmem:[%s3 + $0xa0] sm:$0xff]
  %v736 = vld [vmem:[%s3 + $0xa8] sm:$0xff]
  %v737 = vld [vmem:[%s3 + $0xb0] sm:$0xff]
  %v738 = vld [vmem:[%s3 + $0xb8] sm:$0xff]
  %v739 = vld [vmem:[%s3 + $0xc0] sm:$0xff]
  %v740 = vld [vmem:[%s3 + $0xc8] sm:$0xff]
  %v741 = vld [vmem:[%s3 + $0xd0] sm:$0xff]
  %v742 = vld [vmem:[%s3 + $0xd8] sm:$0xff]
  %v743 = vld [vmem:[%s3 + $0xe0] sm:$0xff]
  %v744 = vld [vmem:[%s3 + $0xe8] sm:$0xff]
  %v745 = vld [vmem:[%s3 + $0xf0] sm:$0xff]
  %v746 = vld [vmem:[%s3 + $0xf8] sm:$0xff]
  %v747 = vld [vmem:[%s3 + $0x100] sm:$0xff]
  %v748 = vld [vmem:[%s3 + $0x108] sm:$0xff]
  %v749 = vld [vmem:[%s3 + $0x110] sm:$0xff]
  %v750 = vld [vmem:[%s3 + $0x118] sm:$0xff]
  %v751 = vld [vmem:[%s3 + $0x120] sm:$0xff]
  %v752 = vld [vmem:[%s3 + $0x128] sm:$0xff]
  %v753 = vld [vmem:[%s3 + $0x130] sm:$0xff]
  %v754 = vld [vmem:[%s3 + $0x138] sm:$0xff]
  %v755 = vld [vmem:[%s3 + $0x140] sm:$0xff]
  %v756 = vld [vmem:[%s3 + $0x148] sm:$0xff]
  %v757 = vld [vmem:[%s3 + $0x150] sm:$0xff]
  %v758 = vld [vmem:[%s3 + $0x158] sm:$0xff]
  %v759 = vld [vmem:[%s3 + $0x160] sm:$0xff]
  %v760 = vld [vmem:[%s3 + $0x168] sm:$0xff]
  %v761 = vld [vmem:[%s3 + $0x170] sm:$0xff]
  %v762 = vld [vmem:[%s3 + $0x178] sm:$0xff]
  %v763 = vld [vmem:[%s3 + $0x180] sm:$0xff]
  %v764 = vld [vmem:[%s3 + $0x188] sm:$0xff]
  %v765 = vld [vmem:[%s3 + $0x190] sm:$0xff]
  %v766 = vld [vmem:[%s3 + $0x198] sm:$0xff]
  %v767 = vld [vmem:[%s3 + $0x1a0] sm:$0xff]
  %v768 = vld [vmem:[%s3 + $0x1a8] sm:$0xff]
  %v769 = vld [vmem:[%s3 + $0x1b0] sm:$0xff]
  %v770 = vld [vmem:[%s3 + $0x1b8] sm:$0xff]
  %v771 = vld [vmem:[%s3 + $0x1c0] sm:$0xff]
  %v772 = vld [vmem:[%s3 + $0x1c8] sm:$0xff]
  %v773 = vld [vmem:[%s3 + $0x1d0] sm:$0xff]
  %v774 = vld [vmem:[%s3 + $0x1d8] sm:$0xff]
  %v775 = vld [vmem:[%s3 + $0x1e0] sm:$0xff]
  %v776 = vld [vmem:[%s3 + $0x1e8] sm:$0xff]
  %v777 = vld [vmem:[%s3 + $0x1f0] sm:$0xff]
  %v778 = vld [vmem:[%s3 + $0x1f8] sm:$0xff]
  %v779 = vld [vmem:[%s3 + $0x200] sm:$0xff]
  %v780 = vld [vmem:[%s3 + $0x208] sm:$0xff]
  %v781 = vld [vmem:[%s3 + $0x210] sm:$0xff]
  %v782 = vld [vmem:[%s3 + $0x218] sm:$0xff]
  %v783 = vld [vmem:[%s3 + $0x220] sm:$0xff]
  %v784 = vld [vmem:[%s3 + $0x228] sm:$0xff]
  %v785 = vld [vmem:[%s3 + $0x230] sm:$0xff]
  %v786 = vld [vmem:[%s3 + $0x238] sm:$0xff]
  %v787 = vld [vmem:[%s3 + $0x240] sm:$0xff]
  %v788 = vld [vmem:[%s3 + $0x248] sm:$0xff]
  %v789 = vld [vmem:[%s3 + $0x250] sm:$0xff]
  %v790 = vld [vmem:[%s3 + $0x258] sm:$0xff]
  %v791 = vld [vmem:[%s3 + $0x260] sm:$0xff]
  %v792 = vld [vmem:[%s3 + $0x268] sm:$0xff]
  %v793 = vld [vmem:[%s3 + $0x270] sm:$0xff]
  %v794 = vld [vmem:[%s3 + $0x278] sm:$0xff]
  %v795 = vld [vmem:[%s3 + $0x280] sm:$0xff]
  %v796 = vld [vmem:[%s3 + $0x288] sm:$0xff]
  %v797 = vld [vmem:[%s3 + $0x290] sm:$0xff]
  %v798 = vld [vmem:[%s3 + $0x298] sm:$0xff]
  %v799 = vld [vmem:[%s3 + $0x2a0] sm:$0xff]
  %v800 = vld [vmem:[%s3 + $0x2a8] sm:$0xff]
  %v801 = vld [vmem:[%s3 + $0x2b0] sm:$0xff]
  %v802 = vld [vmem:[%s3 + $0x2b8] sm:$0xff]
  %v803 = vld [vmem:[%s3 + $0x2c0] sm:$0xff]
  %v804 = vld [vmem:[%s3 + $0x2c8] sm:$0xff]
  %v805 = vld [vmem:[%s3 + $0x2d0] sm:$0xff]
  %v806 = vld [vmem:[%s3 + $0x2d8] sm:$0xff]
  %v807 = vld [vmem:[%s3 + $0x2e0] sm:$0xff]
  %v808 = vld [vmem:[%s3 + $0x2e8] sm:$0xff]
  %v809 = vld [vmem:[%s3 + $0x2f0] sm:$0xff]
  %v810 = vld [vmem:[%s3 + $0x2f8] sm:$0xff]
  %v811 = vld [vmem:[%s3 + $0x300] sm:$0xff]
  %v812 = vld [vmem:[%s3 + $0x308] sm:$0xff]
  %v813 = vld [vmem:[%s3 + $0x310] sm:$0xff]
  %v814 = vld [vmem:[%s3 + $0x318] sm:$0xff]
  %v815 = vld [vmem:[%s3 + $0x320] sm:$0xff]
  %v816 = vld [vmem:[%s3 + $0x328] sm:$0xff]
  %v817 = vld [vmem:[%s3 + $0x330] sm:$0xff]
  %v818 = vld [vmem:[%s3 + $0x338] sm:$0xff]
  %v819 = vld [vmem:[%s3 + $0x340] sm:$0xff]
  %v820 = vld [vmem:[%s3 + $0x348] sm:$0xff]
  %v821 = vld [vmem:[%s3 + $0x350] sm:$0xff]
  %v822 = vld [vmem:[%s3 + $0x358] sm:$0xff]
  %v823 = vld [vmem:[%s3 + $0x360] sm:$0xff]
  %v824 = vld [vmem:[%s3 + $0x368] sm:$0xff]
  %v825 = vld [vmem:[%s3 + $0x370] sm:$0xff]
  %v826 = vld [vmem:[%s3 + $0x378] sm:$0xff]
  %v827 = vld [vmem:[%s3 + $0x380] sm:$0xff]
  %v828 = vld [vmem:[%s3 + $0x388] sm:$0xff]
  %v829 = vld [vmem:[%s3 + $0x390] sm:$0xff]
  %v830 = vld [vmem:[%s3 + $0x398] sm:$0xff]
  %v831 = vld [vmem:[%s3 + $0x3a0] sm:$0xff]
  %v832 = vld [vmem:[%s3 + $0x3a8] sm:$0xff]
  %v833 = vld [vmem:[%s3 + $0x3b0] sm:$0xff]
  %v834 = vld [vmem:[%s3 + $0x3b8] sm:$0xff]
  %v835 = vld [vmem:[%s3 + $0x3c0] sm:$0xff]
  %v836 = vld [vmem:[%s3 + $0x3c8] sm:$0xff]
  %v837 = vld [vmem:[%s3 + $0x3d0] sm:$0xff]
  %v838 = vld [vmem:[%s3 + $0x3d8] sm:$0xff]
  %v839 = vld [vmem:[%s3 + $0x3e0] sm:$0xff]
  %v840 = vld [vmem:[%s3 + $0x3e8] sm:$0xff]
  %v841 = vld [vmem:[%s3 + $0x3f0] sm:$0xff]
  %v842 = vld [vmem:[%s3 + $0x3f8] sm:$0xff]
  %v843 = vld [vmem:[%s3 + $0x400] sm:$0xff]
  %v844 = vld [vmem:[%s3 + $0x408] sm:$0xff]
  %v845 = vld [vmem:[%s3 + $0x410] sm:$0xff]
  %v846 = vld [vmem:[%s3 + $0x418] sm:$0xff]
  %v847 = vld [vmem:[%s3 + $0x420] sm:$0xff]
  %v848 = vld [vmem:[%s3 + $0x428] sm:$0xff]
  %v849 = vld [vmem:[%s3 + $0x430] sm:$0xff]
  %v850 = vld [vmem:[%s3 + $0x438] sm:$0xff]
  %v851 = vld [vmem:[%s3 + $0x440] sm:$0xff]
  %v852 = vld [vmem:[%s3 + $0x448] sm:$0xff]
  %v853 = vld [vmem:[%s3 + $0x450] sm:$0xff]
  %v854 = vld [vmem:[%s3 + $0x458] sm:$0xff]
  %v855 = vld [vmem:[%s3 + $0x460] sm:$0xff]
  %v856 = vld [vmem:[%s3 + $0x468] sm:$0xff]
  %v857 = vld [vmem:[%s3 + $0x470] sm:$0xff]
  %v858 = vld [vmem:[%s3 + $0x478] sm:$0xff]
  %859 = vmatprep.subr.mxu0 0.0
  %860 = vmatpush1.msra.mxu0 %v730
  %861 = vmatprep.subr.mxu0 0.0
  %862 = vmatpush1.msra.mxu0 %v729
  %863 = vmatprep.subr.mxu0 0.0
  %864 = vmatpush1.msra.mxu0 %v728
  %865 = vmatprep.subr.mxu0 0.0
  %866 = vmatpush1.msra.mxu0 %v727
  %867 = vmatprep.subr.mxu0 0.0
  %868 = vmatpush1.msra.mxu0 %v726
  %869 = vmatprep.subr.mxu0 0.0
  %870 = vmatpush1.msra.mxu0 %v725
  %871 = vmatprep.subr.mxu0 0.0
  %872 = vmatpush1.msra.mxu0 %v724
  %873 = vmatprep.subr.mxu0 0.0
  %874 = vmatpush1.msra.mxu0 %v723
  %875 = vmatprep.subr.mxu0 0.0
  %876 = vmatpush1.msra.mxu0 %v722
  %877 = vmatprep.subr.mxu0 0.0
  %878 = vmatpush1.msra.mxu0 %v721
  %879 = vmatprep.subr.mxu0 0.0
  %880 = vmatpush1.msra.mxu0 %v720
  %881 = vmatprep.subr.mxu0 0.0
  %882 = vmatpush1.msra.mxu0 %v719
  %883 = vmatprep.subr.mxu0 0.0
  %884 = vmatpush1.msra.mxu0 %v718
  %885 = vmatprep.subr.mxu0 0.0
  %886 = vmatpush1.msra.mxu0 %v717
  %887 = vmatprep.subr.mxu0 0.0
  %888 = vmatpush1.msra.mxu0 %v716
  %889 = vmatprep.subr.mxu0 0.0
  %890 = vmatpush1.msra.mxu0 %v715
  %891 = vmatprep.subr.mxu0 0.0
  %892 = vmatpush2.msra.mxu0 %v746
  %893 = vmatprep.subr.mxu0 0.0
  %894 = vmatpush2.msra.mxu0 %v745
  %895 = vmatprep.subr.mxu0 0.0
  %896 = vmatpush2.msra.mxu0 %v744
  %897 = vmatprep.subr.mxu0 0.0
  %898 = vmatpush2.msra.mxu0 %v743
  %899 = vmatprep.subr.mxu0 0.0
  %900 = vmatpush2.msra.mxu0 %v742
  %901 = vmatprep.subr.mxu0 0.0
  %902 = vmatpush2.msra.mxu0 %v741
  %903 = vmatprep.subr.mxu0 0.0
  %904 = vmatpush2.msra.mxu0 %v740
  %905 = vmatprep.subr.mxu0 0.0
  %906 = vmatpush2.msra.mxu0 %v739
  %907 = vmatprep.subr.mxu0 0.0
  %908 = vmatpush2.msra.mxu0 %v738
  %909 = vmatprep.subr.mxu0 0.0
  %910 = vmatpush2.msra.mxu0 %v737
  %911 = vmatprep.subr.mxu0 0.0
  %912 = vmatpush2.msra.mxu0 %v736
  %913 = vmatprep.subr.mxu0 0.0
  %914 = vmatpush2.msra.mxu0 %v735
  %915 = vmatprep.subr.mxu0 0.0
  %916 = vmatpush2.msra.mxu0 %v734
  %917 = vmatprep.subr.mxu0 0.0
  %918 = vmatpush2.msra.mxu0 %v733
  %919 = vmatprep.subr.mxu0 0.0
  %920 = vmatpush2.msra.mxu0 %v732
  %921 = vmatprep.subr.mxu0 0.0
  %922 = vmatpush2.msra.mxu0 %v731
  %923 = vmatprep.mubr.f32.mxu0 %v557
  %924 = vmatmul.mubr.f32.gmra.mxu0 %v537
  %v925 = vpop.f32.mrf.mxu0
  %v926 = vadd.f32 0.0, %v925
  %v927 = vpop.f32.mrf.mxu0
  %928 = vmatprep.mubr.f32.mxu0 %v562
  %929 = vmatmul.mubr.f32.gmra.mxu0 %v542
  %v930 = vpop.f32.mrf.mxu0
  %v931 = vadd.f32 0.0, %v930
  %v932 = vpop.f32.mrf.mxu0
  %933 = vmatprep.mubr.f32.mxu0 %v567
  %934 = vmatmul.mubr.f32.gmra.mxu0 %v547
  %v935 = vpop.f32.mrf.mxu0
  %v936 = vadd.f32 0.0, %v935
  %v937 = vpop.f32.mrf.mxu0
  %938 = vmatprep.mubr.f32.mxu0 %v572
  %939 = vmatmul.mubr.f32.gmra.mxu0 %v552
  %v940 = vpop.f32.mrf.mxu0
  %v941 = vadd.f32 0.0, %v940
  %v942 = vpop.f32.mrf.mxu0
  %943 = vdwg.mxu0
  %944 = vmatprep.subr.mxu0 0.0
  %945 = vmatpush1.msra.mxu0 %v762
  %946 = vmatprep.subr.mxu0 0.0
  %947 = vmatpush1.msra.mxu0 %v761
  %948 = vmatprep.subr.mxu0 0.0
  %949 = vmatpush1.msra.mxu0 %v760
  %950 = vmatprep.subr.mxu0 0.0
  %951 = vmatpush1.msra.mxu0 %v759
  %952 = vmatprep.subr.mxu0 0.0
  %953 = vmatpush1.msra.mxu0 %v758
  %954 = vmatprep.subr.mxu0 0.0
  %955 = vmatpush1.msra.mxu0 %v757
  %956 = vmatprep.subr.mxu0 0.0
  %957 = vmatpush1.msra.mxu0 %v756
  %958 = vmatprep.subr.mxu0 0.0
  %959 = vmatpush1.msra.mxu0 %v755
  %960 = vmatprep.subr.mxu0 0.0
  %961 = vmatpush1.msra.mxu0 %v754
  %962 = vmatprep.subr.mxu0 0.0
  %963 = vmatpush1.msra.mxu0 %v753
  %964 = vmatprep.subr.mxu0 0.0
  %965 = vmatpush1.msra.mxu0 %v752
  %966 = vmatprep.subr.mxu0 0.0
  %967 = vmatpush1.msra.mxu0 %v751
  %968 = vmatprep.subr.mxu0 0.0
  %969 = vmatpush1.msra.mxu0 %v750
  %970 = vmatprep.subr.mxu0 0.0
  %971 = vmatpush1.msra.mxu0 %v749
  %972 = vmatprep.subr.mxu0 0.0
  %973 = vmatpush1.msra.mxu0 %v748
  %974 = vmatprep.subr.mxu0 0.0
  %975 = vmatpush1.msra.mxu0 %v747
  %976 = vmatprep.subr.mxu0 0.0
  %977 = vmatpush2.msra.mxu0 %v778
  %978 = vmatprep.subr.mxu0 0.0
  %979 = vmatpush2.msra.mxu0 %v777
  %980 = vmatprep.subr.mxu0 0.0
  %981 = vmatpush2.msra.mxu0 %v776
  %982 = vmatprep.subr.mxu0 0.0
  %983 = vmatpush2.msra.mxu0 %v775
  %984 = vmatprep.subr.mxu0 0.0
  %985 = vmatpush2.msra.mxu0 %v774
  %986 = vmatprep.subr.mxu0 0.0
  %987 = vmatpush2.msra.mxu0 %v773
  %988 = vmatprep.subr.mxu0 0.0
  %989 = vmatpush2.msra.mxu0 %v772
  %990 = vmatprep.subr.mxu0 0.0
  %991 = vmatpush2.msra.mxu0 %v771
  %992 = vmatprep.subr.mxu0 0.0
  %993 = vmatpush2.msra.mxu0 %v770
  %994 = vmatprep.subr.mxu0 0.0
  %995 = vmatpush2.msra.mxu0 %v769
  %996 = vmatprep.subr.mxu0 0.0
  %997 = vmatpush2.msra.mxu0 %v768
  %998 = vmatprep.subr.mxu0 0.0
  %999 = vmatpush2.msra.mxu0 %v767
  %1000 = vmatprep.subr.mxu0 0.0
  %1001 = vmatpush2.msra.mxu0 %v766
  %1002 = vmatprep.subr.mxu0 0.0
  %1003 = vmatpush2.msra.mxu0 %v765
  %1004 = vmatprep.subr.mxu0 0.0
  %1005 = vmatpush2.msra.mxu0 %v764
  %1006 = vmatprep.subr.mxu0 0.0
  %1007 = vmatpush2.msra.mxu0 %v763
  %1008 = vmatprep.mubr.f32.mxu0 %v597
  %1009 = vmatmul.mubr.f32.gmra.mxu0 %v577
  %v1010 = vpop.f32.mrf.mxu0
  %v1011 = vadd.f32 %v926, %v1010
  %v1012 = vpop.f32.mrf.mxu0
  %1013 = vmatprep.mubr.f32.mxu0 %v602
  %1014 = vmatmul.mubr.f32.gmra.mxu0 %v582
  %v1015 = vpop.f32.mrf.mxu0
  %v1016 = vadd.f32 %v931, %v1015
  %v1017 = vpop.f32.mrf.mxu0
  %1018 = vmatprep.mubr.f32.mxu0 %v607
  %1019 = vmatmul.mubr.f32.gmra.mxu0 %v587
  %v1020 = vpop.f32.mrf.mxu0
  %v1021 = vadd.f32 %v936, %v1020
  %v1022 = vpop.f32.mrf.mxu0
  %1023 = vmatprep.mubr.f32.mxu0 %v612
  %1024 = vmatmul.mubr.f32.gmra.mxu0 %v592
  %v1025 = vpop.f32.mrf.mxu0
  %v1026 = vadd.f32 %v941, %v1025
  %v1027 = vpop.f32.mrf.mxu0
  %1028 = vdwg.mxu0
  %1029 = vmatprep.subr.mxu0 0.0
  %1030 = vmatpush1.msra.mxu0 %v794
  %1031 = vmatprep.subr.mxu0 0.0
  %1032 = vmatpush1.msra.mxu0 %v793
  %1033 = vmatprep.subr.mxu0 0.0
  %1034 = vmatpush1.msra.mxu0 %v792
  %1035 = vmatprep.subr.mxu0 0.0
  %1036 = vmatpush1.msra.mxu0 %v791
  %1037 = vmatprep.subr.mxu0 0.0
  %1038 = vmatpush1.msra.mxu0 %v790
  %1039 = vmatprep.subr.mxu0 0.0
  %1040 = vmatpush1.msra.mxu0 %v789
  %1041 = vmatprep.subr.mxu0 0.0
  %1042 = vmatpush1.msra.mxu0 %v788
  %1043 = vmatprep.subr.mxu0 0.0
  %1044 = vmatpush1.msra.mxu0 %v787
  %1045 = vmatprep.subr.mxu0 0.0
  %1046 = vmatpush1.msra.mxu0 %v786
  %1047 = vmatprep.subr.mxu0 0.0
  %1048 = vmatpush1.msra.mxu0 %v785
  %1049 = vmatprep.subr.mxu0 0.0
  %1050 = vmatpush1.msra.mxu0 %v784
  %1051 = vmatprep.subr.mxu0 0.0
  %1052 = vmatpush1.msra.mxu0 %v783
  %1053 = vmatprep.subr.mxu0 0.0
  %1054 = vmatpush1.msra.mxu0 %v782
  %1055 = vmatprep.subr.mxu0 0.0
  %1056 = vmatpush1.msra.mxu0 %v781
  %1057 = vmatprep.subr.mxu0 0.0
  %1058 = vmatpush1.msra.mxu0 %v780
  %1059 = vmatprep.subr.mxu0 0.0
  %1060 = vmatpush1.msra.mxu0 %v779
  %1061 = vmatprep.subr.mxu0 0.0
  %1062 = vmatpush2.msra.mxu0 %v810
  %1063 = vmatprep.subr.mxu0 0.0
  %1064 = vmatpush2.msra.mxu0 %v809
  %1065 = vmatprep.subr.mxu0 0.0
  %1066 = vmatpush2.msra.mxu0 %v808
  %1067 = vmatprep.subr.mxu0 0.0
  %1068 = vmatpush2.msra.mxu0 %v807
  %1069 = vmatprep.subr.mxu0 0.0
  %1070 = vmatpush2.msra.mxu0 %v806
  %1071 = vmatprep.subr.mxu0 0.0
  %1072 = vmatpush2.msra.mxu0 %v805
  %1073 = vmatprep.subr.mxu0 0.0
  %1074 = vmatpush2.msra.mxu0 %v804
  %1075 = vmatprep.subr.mxu0 0.0
  %1076 = vmatpush2.msra.mxu0 %v803
  %1077 = vmatprep.subr.mxu0 0.0
  %1078 = vmatpush2.msra.mxu0 %v802
  %1079 = vmatprep.subr.mxu0 0.0
  %1080 = vmatpush2.msra.mxu0 %v801
  %1081 = vmatprep.subr.mxu0 0.0
  %1082 = vmatpush2.msra.mxu0 %v800
  %1083 = vmatprep.subr.mxu0 0.0
  %1084 = vmatpush2.msra.mxu0 %v799
  %1085 = vmatprep.subr.mxu0 0.0
  %1086 = vmatpush2.msra.mxu0 %v798
  %1087 = vmatprep.subr.mxu0 0.0
  %1088 = vmatpush2.msra.mxu0 %v797
  %1089 = vmatprep.subr.mxu0 0.0
  %1090 = vmatpush2.msra.mxu0 %v796
  %1091 = vmatprep.subr.mxu0 0.0
  %1092 = vmatpush2.msra.mxu0 %v795
  %1093 = vmatprep.mubr.f32.mxu0 %v637
  %1094 = vmatmul.mubr.f32.gmra.mxu0 %v617
  %v1095 = vpop.f32.mrf.mxu0
  %v1096 = vadd.f32 %v1011, %v1095
  %v1097 = vpop.f32.mrf.mxu0
  %1098 = vmatprep.mubr.f32.mxu0 %v642
  %1099 = vmatmul.mubr.f32.gmra.mxu0 %v622
  %v1100 = vpop.f32.mrf.mxu0
  %v1101 = vadd.f32 %v1016, %v1100
  %v1102 = vpop.f32.mrf.mxu0
  %1103 = vmatprep.mubr.f32.mxu0 %v647
  %1104 = vmatmul.mubr.f32.gmra.mxu0 %v627
  %v1105 = vpop.f32.mrf.mxu0
  %v1106 = vadd.f32 %v1021, %v1105
  %v1107 = vpop.f32.mrf.mxu0
  %1108 = vmatprep.mubr.f32.mxu0 %v652
  %1109 = vmatmul.mubr.f32.gmra.mxu0 %v632
  %v1110 = vpop.f32.mrf.mxu0
  %v1111 = vadd.f32 %v1026, %v1110
  %v1112 = vpop.f32.mrf.mxu0
  %1113 = vdwg.mxu0
  %1114 = vmatprep.subr.mxu0 0.0
  %1115 = vmatpush1.msra.mxu0 %v826
  %1116 = vmatprep.subr.mxu0 0.0
  %1117 = vmatpush1.msra.mxu0 %v825
  %1118 = vmatprep.subr.mxu0 0.0
  %1119 = vmatpush1.msra.mxu0 %v824
  %1120 = vmatprep.subr.mxu0 0.0
  %1121 = vmatpush1.msra.mxu0 %v823
  %1122 = vmatprep.subr.mxu0 0.0
  %1123 = vmatpush1.msra.mxu0 %v822
  %1124 = vmatprep.subr.mxu0 0.0
  %1125 = vmatpush1.msra.mxu0 %v821
  %1126 = vmatprep.subr.mxu0 0.0
  %1127 = vmatpush1.msra.mxu0 %v820
  %1128 = vmatprep.subr.mxu0 0.0
  %1129 = vmatpush1.msra.mxu0 %v819
  %1130 = vmatprep.subr.mxu0 0.0
  %1131 = vmatpush1.msra.mxu0 %v818
  %1132 = vmatprep.subr.mxu0 0.0
  %1133 = vmatpush1.msra.mxu0 %v817
  %1134 = vmatprep.subr.mxu0 0.0
  %1135 = vmatpush1.msra.mxu0 %v816
  %1136 = vmatprep.subr.mxu0 0.0
  %1137 = vmatpush1.msra.mxu0 %v815
  %1138 = vmatprep.subr.mxu0 0.0
  %1139 = vmatpush1.msra.mxu0 %v814
  %1140 = vmatprep.subr.mxu0 0.0
  %1141 = vmatpush1.msra.mxu0 %v813
  %1142 = vmatprep.subr.mxu0 0.0
  %1143 = vmatpush1.msra.mxu0 %v812
  %1144 = vmatprep.subr.mxu0 0.0
  %1145 = vmatpush1.msra.mxu0 %v811
  %1146 = vmatprep.subr.mxu0 0.0
  %1147 = vmatpush2.msra.mxu0 %v842
  %1148 = vmatprep.subr.mxu0 0.0
  %1149 = vmatpush2.msra.mxu0 %v841
  %1150 = vmatprep.subr.mxu0 0.0
  %1151 = vmatpush2.msra.mxu0 %v840
  %1152 = vmatprep.subr.mxu0 0.0
  %1153 = vmatpush2.msra.mxu0 %v839
  %1154 = vmatprep.subr.mxu0 0.0
  %1155 = vmatpush2.msra.mxu0 %v838
  %1156 = vmatprep.subr.mxu0 0.0
  %1157 = vmatpush2.msra.mxu0 %v837
  %1158 = vmatprep.subr.mxu0 0.0
  %1159 = vmatpush2.msra.mxu0 %v836
  %1160 = vmatprep.subr.mxu0 0.0
  %1161 = vmatpush2.msra.mxu0 %v835
  %1162 = vmatprep.subr.mxu0 0.0
  %1163 = vmatpush2.msra.mxu0 %v834
  %1164 = vmatprep.subr.mxu0 0.0
  %1165 = vmatpush2.msra.mxu0 %v833
  %1166 = vmatprep.subr.mxu0 0.0
  %1167 = vmatpush2.msra.mxu0 %v832
  %1168 = vmatprep.subr.mxu0 0.0
  %1169 = vmatpush2.msra.mxu0 %v831
  %1170 = vmatprep.subr.mxu0 0.0
  %1171 = vmatpush2.msra.mxu0 %v830
  %1172 = vmatprep.subr.mxu0 0.0
  %1173 = vmatpush2.msra.mxu0 %v829
  %1174 = vmatprep.subr.mxu0 0.0
  %1175 = vmatpush2.msra.mxu0 %v828
  %1176 = vmatprep.subr.mxu0 0.0
  %1177 = vmatpush2.msra.mxu0 %v827
  %1178 = vmatprep.mubr.f32.mxu0 %v677
  %1179 = vmatmul.mubr.f32.gmra.mxu0 %v657
  %v1180 = vpop.f32.mrf.mxu0
  %v1181 = vadd.f32 %v1096, %v1180
  %v1182 = vpop.f32.mrf.mxu0
  %1183 = vmatprep.mubr.f32.mxu0 %v682
  %1184 = vmatmul.mubr.f32.gmra.mxu0 %v662
  %v1185 = vpop.f32.mrf.mxu0
  %v1186 = vadd.f32 %v1101, %v1185
  %v1187 = vpop.f32.mrf.mxu0
  %1188 = vmatprep.mubr.f32.mxu0 %v687
  %1189 = vmatmul.mubr.f32.gmra.mxu0 %v667
  %v1190 = vpop.f32.mrf.mxu0
  %v1191 = vadd.f32 %v1106, %v1190
  %v1192 = vpop.f32.mrf.mxu0
  %1193 = vmatprep.mubr.f32.mxu0 %v692
  %1194 = vmatmul.mubr.f32.gmra.mxu0 %v672
  %v1195 = vpop.f32.mrf.mxu0
  %v1196 = vadd.f32 %v1111, %v1195
  %v1197 = vpop.f32.mrf.mxu0
  %1198 = vdwg.mxu0
  %1199 = vmatprep.subr.mxu0 0.0
  %1200 = vmatpush1.msra.mxu0 %v858
  %1201 = vmatprep.subr.mxu0 0.0
  %1202 = vmatpush1.msra.mxu0 %v857
  %1203 = vmatprep.subr.mxu0 0.0
  %1204 = vmatpush1.msra.mxu0 %v856
  %1205 = vmatprep.subr.mxu0 0.0
  %1206 = vmatpush1.msra.mxu0 %v855
  %1207 = vmatprep.subr.mxu0 0.0
  %1208 = vmatpush1.msra.mxu0 %v854
  %1209 = vmatprep.subr.mxu0 0.0
  %1210 = vmatpush1.msra.mxu0 %v853
  %1211 = vmatprep.subr.mxu0 0.0
  %1212 = vmatpush1.msra.mxu0 %v852
  %1213 = vmatprep.subr.mxu0 0.0
  %1214 = vmatpush1.msra.mxu0 %v851
  %1215 = vmatprep.subr.mxu0 0.0
  %1216 = vmatpush1.msra.mxu0 %v850
  %1217 = vmatprep.subr.mxu0 0.0
  %1218 = vmatpush1.msra.mxu0 %v849
  %1219 = vmatprep.subr.mxu0 0.0
  %1220 = vmatpush1.msra.mxu0 %v848
  %1221 = vmatprep.subr.mxu0 0.0
  %1222 = vmatpush1.msra.mxu0 %v847
  %1223 = vmatprep.subr.mxu0 0.0
  %1224 = vmatpush1.msra.mxu0 %v846
  %1225 = vmatprep.subr.mxu0 0.0
  %1226 = vmatpush1.msra.mxu0 %v845
  %1227 = vmatprep.subr.mxu0 0.0
  %1228 = vmatpush1.msra.mxu0 %v844
  %1229 = vmatprep.subr.mxu0 0.0
  %1230 = vmatpush1.msra.mxu0 %v843
  %1231 = vmatprep.subr.mxu0 0.0
  %1232 = vmatpush2.msra.mxu0 0.0
  %1233 = vmatprep.subr.mxu0 0.0
  %1234 = vmatpush2.msra.mxu0 0.0
  %1235 = vmatprep.subr.mxu0 0.0
  %1236 = vmatpush2.msra.mxu0 0.0
  %1237 = vmatprep.subr.mxu0 0.0
  %1238 = vmatpush2.msra.mxu0 0.0
  %1239 = vmatprep.subr.mxu0 0.0
  %1240 = vmatpush2.msra.mxu0 0.0
  %1241 = vmatprep.subr.mxu0 0.0
  %1242 = vmatpush2.msra.mxu0 0.0
  %1243 = vmatprep.subr.mxu0 0.0
  %1244 = vmatpush2.msra.mxu0 0.0
  %1245 = vmatprep.subr.mxu0 0.0
  %1246 = vmatpush2.msra.mxu0 0.0
  %1247 = vmatprep.subr.mxu0 0.0
  %1248 = vmatpush2.msra.mxu0 0.0
  %1249 = vmatprep.subr.mxu0 0.0
  %1250 = vmatpush2.msra.mxu0 0.0
  %1251 = vmatprep.subr.mxu0 0.0
  %1252 = vmatpush2.msra.mxu0 0.0
  %1253 = vmatprep.subr.mxu0 0.0
  %1254 = vmatpush2.msra.mxu0 0.0
  %1255 = vmatprep.subr.mxu0 0.0
  %1256 = vmatpush2.msra.mxu0 0.0
  %1257 = vmatprep.subr.mxu0 0.0
  %1258 = vmatpush2.msra.mxu0 0.0
  %1259 = vmatprep.subr.mxu0 0.0
  %1260 = vmatpush2.msra.mxu0 0.0
  %1261 = vmatprep.subr.mxu0 0.0
  %1262 = vmatpush2.msra.mxu0 0.0
  %1263 = vmatprep.mubr.f32.mxu0 0.0
  %1264 = vmatmul.mubr.f32.gmra.mxu0 %v697
  %v1265 = vpop.f32.mrf.mxu0
  %v1266 = vadd.f32 %v1181, %v1265
  %v1267 = vpop.f32.mrf.mxu0
  %1268 = vmatprep.mubr.f32.mxu0 0.0
  %1269 = vmatmul.mubr.f32.gmra.mxu0 %v702
  %v1270 = vpop.f32.mrf.mxu0
  %v1271 = vadd.f32 %v1186, %v1270
  %v1272 = vpop.f32.mrf.mxu0
  %1273 = vmatprep.mubr.f32.mxu0 0.0
  %1274 = vmatmul.mubr.f32.gmra.mxu0 %v707
  %v1275 = vpop.f32.mrf.mxu0
  %v1276 = vadd.f32 %v1191, %v1275
  %v1277 = vpop.f32.mrf.mxu0
  %1278 = vmatprep.mubr.f32.mxu0 0.0
  %1279 = vmatmul.mubr.f32.gmra.mxu0 %v712
  %v1280 = vpop.f32.mrf.mxu0
  %v1281 = vadd.f32 %v1196, %v1280
  %v1282 = vpop.f32.mrf.mxu0
  %1283 = vdwg.mxu0
  %v1284 = vld [vmem:[%s8 + $0x2] sm:$0x1]
  %v1285 = vld [vmem:[%s8 + $0x3] sm:$0x1]
  %v1286 = vadd.f32 %v1266, %v1271
  %v1287 = vadd.f32 %v1286, %v1276
  %v1288 = vadd.f32 %v1287, %v1281
  %v1289 = vrot.slane %v1288, 4
  %v1290 = vadd.f32 %v1288, %v1289
  %v1291 = vrot.slane %v1290, 2
  %v1292 = vadd.f32 %v1290, %v1291
  %v1293 = vrot.slane %v1292, 1
  %v1294 = vadd.f32 %v1292, %v1293
  %v1295 = vmul.f32 %v1294, 0.03125
  %v1296 = vsub.f32 %v1266, %v1295
  %v1297 = vsub.f32 %v1271, %v1295
  %v1298 = vsub.f32 %v1276, %v1295
  %v1299 = vsub.f32 %v1281, %v1295
  %v1300 = vmul.f32 %v1296, %v1296
  %v1301 = vmul.f32 %v1297, %v1297
  %v1302 = vmul.f32 %v1298, %v1298
  %v1303 = vmul.f32 %v1299, %v1299
  %v1304 = vadd.f32 %v1300, %v1301
  %v1305 = vadd.f32 %v1304, %v1302
  %v1306 = vadd.f32 %v1305, %v1303
  %v1307 = vrot.slane %v1306, 4
  %v1308 = vadd.f32 %v1306, %v1307
  %v1309 = vrot.slane %v1308, 2
  %v1310 = vadd.f32 %v1308, %v1309
  %v1311 = vrot.slane %v1310, 1
  %v1312 = vadd.f32 %v1310, %v1311
  %v1313 = vmul.f32 %v1312, 0.03125
  %v1314 = vadd.f32 %v1313, 1e-05
  %v1315 = vrsqrt.pop %v1314
  %v1316 = vmul.f32 %v1296, %v1315
  %v1317 = vmul.f32 %v1297, %v1315
  %v1318 = vmul.f32 %v1298, %v1315
  %v1319 = vmul.f32 %v1299, %v1315
  %v1320 = vlaneseq
  %v1321 = vshrl.u32 %v1320, 7
  %v1322 = vsub.s32 0, %v1321
  %v1323 = vrot.slane %v1284, %v1322
  %v1324 = vmul.f32 %v1323, %v1316
  %v1325 = vmul.f32 %v1323, %v1317
  %v1326 = vmul.f32 %v1323, %v1318
  %v1327 = vmul.f32 %v1323, %v1319
  %v1328 = vlaneseq
  %v1329 = vshrl.u32 %v1328, 7
  %v1330 = vsub.s32 0, %v1329
  %v1331 = vrot.slane %v1285, %v1330
  %v1332 = vadd.f32 %v1324, %v1331
  %v1333 = vadd.f32 %v1325, %v1331
  %v1334 = vadd.f32 %v1326, %v1331
  %v1335 = vadd.f32 %v1327, %v1331
  %v1336 = vmax.f32 %v1332, 0.0
  %v1337 = vmax.f32 %v1333, 0.0
  %v1338 = vmax.f32 %v1334, 0.0
  %v1339 = vmax.f32 %v1335, 0.0
  %v1340 = vld [vmem:[%s4] sm:$0xf]
  %v1341 = vld [vmem:[%s4 + $0x4] sm:$0xf]
  %v1342 = vld [vmem:[%s4 + $0x8] sm:$0xf]
  %v1343 = vld [vmem:[%s4 + $0xc] sm:$0xf]
  %v1344 = vld [vmem:[%s4 + $0x10] sm:$0xf]
  %v1345 = vld [vmem:[%s4 + $0x14] sm:$0xf]
  %v1346 = vld [vmem:[%s4 + $0x18] sm:$0xf]
  %v1347 = vld [vmem:[%s4 + $0x1c] sm:$0xf]
  %v1348 = vld [vmem:[%s4 + $0x20] sm:$0xf]
  %v1349 = vunpack.c.l.bf16 %v1340
  %v1350 = vunpack.c.l.bf16 %v1341
  %v1351 = vunpack.c.l.bf16 %v1342
  %v1352 = vunpack.c.l.bf16 %v1343
  %v1353 = vunpack.c.l.bf16 %v1344
  %v1354 = vunpack.c.l.bf16 %v1345
  %v1355 = vunpack.c.l.bf16 %v1346
  %v1356 = vunpack.c.l.bf16 %v1347
  %v1357 = vunpack.c.l.bf16 %v1348
  %v1359 = vsel %vm52, %v1349, 0
  %v1362 = vsel %vm52, %v1350, 0
  %v1365 = vsel %vm52, %v1351, 0
  %v1368 = vsel %vm52, %v1352, 0
  %v1371 = vsel %vm52, %v1353, 0
  %v1374 = vsel %vm52, %v1354, 0
  %v1377 = vsel %vm52, %v1355, 0
  %v1380 = vsel %vm52, %v1356, 0
  %v1383 = vsel %vm52, %v1357, 0
  %1385 = vmatprep.subr.mxu0 0.0
  %1386 = vmatpush1.msra.mxu0 0.0
  %1387 = vmatprep.subr.mxu0 0.0
  %1388 = vmatpush1.msra.mxu0 0.0
  %1389 = vmatprep.subr.mxu0 0.0
  %1390 = vmatpush1.msra.mxu0 0.0
  %1391 = vmatprep.subr.mxu0 0.0
  %1392 = vmatpush1.msra.mxu0 0.0
  %1393 = vmatprep.subr.mxu0 0.0
  %1394 = vmatpush1.msra.mxu0 0.0
  %1395 = vmatprep.subr.mxu0 0.0
  %1396 = vmatpush1.msra.mxu0 0.0
  %1397 = vmatprep.subr.mxu0 0.0
  %1398 = vmatpush1.msra.mxu0 0.0
  %1399 = vmatprep.subr.mxu0 0.0
  %1400 = vmatpush1.msra.mxu0 0.0
  %1401 = vmatprep.subr.mxu0 0.0
  %1402 = vmatpush1.msra.mxu0 0.0
  %1403 = vmatprep.subr.mxu0 0.0
  %1404 = vmatpush1.msra.mxu0 0.0
  %1405 = vmatprep.subr.mxu0 0.0
  %1406 = vmatpush1.msra.mxu0 0.0
  %1407 = vmatprep.subr.mxu0 0.0
  %1408 = vmatpush1.msra.mxu0 0.0
  %1409 = vmatprep.subr.mxu0 0.0
  %1410 = vmatpush1.msra.mxu0 %v1339
  %1411 = vmatprep.subr.mxu0 0.0
  %1412 = vmatpush1.msra.mxu0 %v1338
  %1413 = vmatprep.subr.mxu0 0.0
  %1414 = vmatpush1.msra.mxu0 %v1337
  %1415 = vmatprep.subr.mxu0 0.0
  %1416 = vmatpush1.msra.mxu0 %v1336
  %1417 = vmatprep.subr.mxu0 0.0
  %1418 = vmatpush2.msra.mxu0 0.0
  %1419 = vmatprep.subr.mxu0 0.0
  %1420 = vmatpush2.msra.mxu0 0.0
  %1421 = vmatprep.subr.mxu0 0.0
  %1422 = vmatpush2.msra.mxu0 0.0
  %1423 = vmatprep.subr.mxu0 0.0
  %1424 = vmatpush2.msra.mxu0 0.0
  %1425 = vmatprep.subr.mxu0 0.0
  %1426 = vmatpush2.msra.mxu0 0.0
  %1427 = vmatprep.subr.mxu0 0.0
  %1428 = vmatpush2.msra.mxu0 0.0
  %1429 = vmatprep.subr.mxu0 0.0
  %1430 = vmatpush2.msra.mxu0 0.0
  %1431 = vmatprep.subr.mxu0 0.0
  %1432 = vmatpush2.msra.mxu0 0.0
  %1433 = vmatprep.subr.mxu0 0.0
  %1434 = vmatpush2.msra.mxu0 0.0
  %1435 = vmatprep.subr.mxu0 0.0
  %1436 = vmatpush2.msra.mxu0 0.0
  %1437 = vmatprep.subr.mxu0 0.0
  %1438 = vmatpush2.msra.mxu0 0.0
  %1439 = vmatprep.subr.mxu0 0.0
  %1440 = vmatpush2.msra.mxu0 0.0
  %1441 = vmatprep.subr.mxu0 0.0
  %1442 = vmatpush2.msra.mxu0 0.0
  %1443 = vmatprep.subr.mxu0 0.0
  %1444 = vmatpush2.msra.mxu0 0.0
  %1445 = vmatprep.subr.mxu0 0.0
  %1446 = vmatpush2.msra.mxu0 0.0
  %1447 = vmatprep.subr.mxu0 0.0
  %1448 = vmatpush2.msra.mxu0 0.0
  %1449 = vmatprep.mubr.f32.mxu0 0.0
  %1450 = vmatmul.mubr.f32.gmra.mxu0 %v1359
  %v1451 = vpop.f32.mrf.mxu0
  %v1452 = vadd.f32 0.0, %v1451
  %v1453 = vpop.f32.mrf.mxu0
  %1454 = vmatprep.mubr.f32.mxu0 0.0
  %1455 = vmatmul.mubr.f32.gmra.mxu0 %v1362
  %v1456 = vpop.f32.mrf.mxu0
  %v1457 = vadd.f32 0.0, %v1456
  %v1458 = vpop.f32.mrf.mxu0
  %1459 = vmatprep.mubr.f32.mxu0 0.0
  %1460 = vmatmul.mubr.f32.gmra.mxu0 %v1365
  %v1461 = vpop.f32.mrf.mxu0
  %v1462 = vadd.f32 0.0, %v1461
  %v1463 = vpop.f32.mrf.mxu0
  %1464 = vmatprep.mubr.f32.mxu0 0.0
  %1465 = vmatmul.mubr.f32.gmra.mxu0 %v1368
  %v1466 = vpop.f32.mrf.mxu0
  %v1467 = vadd.f32 0.0, %v1466
  %v1468 = vpop.f32.mrf.mxu0
  %1469 = vmatprep.mubr.f32.mxu0 0.0
  %1470 = vmatmul.mubr.f32.gmra.mxu0 %v1371
  %v1471 = vpop.f32.mrf.mxu0
  %v1472 = vadd.f32 0.0, %v1471
  %v1473 = vpop.f32.mrf.mxu0
  %1474 = vmatprep.mubr.f32.mxu0 0.0
  %1475 = vmatmul.mubr.f32.gmra.mxu0 %v1374
  %v1476 = vpop.f32.mrf.mxu0
  %v1477 = vadd.f32 0.0, %v1476
  %v1478 = vpop.f32.mrf.mxu0
  %1479 = vmatprep.mubr.f32.mxu0 0.0
  %1480 = vmatmul.mubr.f32.gmra.mxu0 %v1377
  %v1481 = vpop.f32.mrf.mxu0
  %v1482 = vadd.f32 0.0, %v1481
  %v1483 = vpop.f32.mrf.mxu0
  %1484 = vmatprep.mubr.f32.mxu0 0.0
  %1485 = vmatmul.mubr.f32.gmra.mxu0 %v1380
  %v1486 = vpop.f32.mrf.mxu0
  %v1487 = vadd.f32 0.0, %v1486
  %v1488 = vpop.f32.mrf.mxu0
  %1489 = vmatprep.mubr.f32.mxu0 0.0
  %1490 = vmatmul.mubr.f32.gmra.mxu0 %v1383
  %v1491 = vpop.f32.mrf.mxu0
  %v1492 = vadd.f32 0.0, %v1491
  %v1493 = vpop.f32.mrf.mxu0
  %1494 = vdwg.mxu0
  %v1495 = vld [vmem:[%s5] sm:$0xff]
  %v1496 = vld [vmem:[%s5 + $0x8] sm:$0xff]
  %v1497 = vld [vmem:[%s5 + $0x10] sm:$0xff]
  %v1498 = vld [vmem:[%s5 + $0x18] sm:$0xff]
  %v1499 = vld [vmem:[%s5 + $0x20] sm:$0xff]
  %v1500 = vld [vmem:[%s5 + $0x28] sm:$0xff]
  %v1501 = vld [vmem:[%s5 + $0x30] sm:$0xff]
  %v1502 = vld [vmem:[%s5 + $0x38] sm:$0xff]
  %v1503 = vld [vmem:[%s5 + $0x40] sm:$0xff]
  %v1504 = vld [vmem:[%s5 + $0x48] sm:$0xff]
  %v1505 = vld [vmem:[%s5 + $0x50] sm:$0xff]
  %v1506 = vld [vmem:[%s5 + $0x58] sm:$0xff]
  %v1507 = vld [vmem:[%s5 + $0x60] sm:$0xff]
  %v1508 = vld [vmem:[%s5 + $0x68] sm:$0xff]
  %v1509 = vld [vmem:[%s5 + $0x70] sm:$0xff]
  %v1510 = vld [vmem:[%s5 + $0x78] sm:$0xff]
  %v1511 = vld [vmem:[%s5 + $0x80] sm:$0xff]
  %v1512 = vld [vmem:[%s5 + $0x88] sm:$0xff]
  %v1513 = vld [vmem:[%s5 + $0x90] sm:$0xff]
  %v1514 = vld [vmem:[%s5 + $0x98] sm:$0xff]
  %v1515 = vld [vmem:[%s5 + $0xa0] sm:$0xff]
  %v1516 = vld [vmem:[%s5 + $0xa8] sm:$0xff]
  %v1517 = vld [vmem:[%s5 + $0xb0] sm:$0xff]
  %v1518 = vld [vmem:[%s5 + $0xb8] sm:$0xff]
  %v1519 = vld [vmem:[%s5 + $0xc0] sm:$0xff]
  %v1520 = vld [vmem:[%s5 + $0xc8] sm:$0xff]
  %v1521 = vld [vmem:[%s5 + $0xd0] sm:$0xff]
  %v1522 = vld [vmem:[%s5 + $0xd8] sm:$0xff]
  %v1523 = vld [vmem:[%s5 + $0xe0] sm:$0xff]
  %v1524 = vld [vmem:[%s5 + $0xe8] sm:$0xff]
  %v1525 = vld [vmem:[%s5 + $0xf0] sm:$0xff]
  %v1526 = vld [vmem:[%s5 + $0xf8] sm:$0xff]
  %v1527 = vld [vmem:[%s5 + $0x100] sm:$0xff]
  %v1528 = vld [vmem:[%s5 + $0x108] sm:$0xff]
  %v1529 = vld [vmem:[%s5 + $0x110] sm:$0xff]
  %v1530 = vld [vmem:[%s5 + $0x118] sm:$0xff]
  %v1531 = vld [vmem:[%s5 + $0x120] sm:$0xff]
  %v1532 = vld [vmem:[%s5 + $0x128] sm:$0xff]
  %v1533 = vld [vmem:[%s5 + $0x130] sm:$0xff]
  %v1534 = vld [vmem:[%s5 + $0x138] sm:$0xff]
  %v1535 = vld [vmem:[%s5 + $0x140] sm:$0xff]
  %v1536 = vld [vmem:[%s5 + $0x148] sm:$0xff]
  %v1537 = vld [vmem:[%s5 + $0x150] sm:$0xff]
  %v1538 = vld [vmem:[%s5 + $0x158] sm:$0xff]
  %v1539 = vld [vmem:[%s5 + $0x160] sm:$0xff]
  %v1540 = vld [vmem:[%s5 + $0x168] sm:$0xff]
  %v1541 = vld [vmem:[%s5 + $0x170] sm:$0xff]
  %v1542 = vld [vmem:[%s5 + $0x178] sm:$0xff]
  %v1543 = vld [vmem:[%s5 + $0x180] sm:$0xff]
  %v1544 = vld [vmem:[%s5 + $0x188] sm:$0xff]
  %v1545 = vld [vmem:[%s5 + $0x190] sm:$0xff]
  %v1546 = vld [vmem:[%s5 + $0x198] sm:$0xff]
  %v1547 = vld [vmem:[%s5 + $0x1a0] sm:$0xff]
  %v1548 = vld [vmem:[%s5 + $0x1a8] sm:$0xff]
  %v1549 = vld [vmem:[%s5 + $0x1b0] sm:$0xff]
  %v1550 = vld [vmem:[%s5 + $0x1b8] sm:$0xff]
  %v1551 = vld [vmem:[%s5 + $0x1c0] sm:$0xff]
  %v1552 = vld [vmem:[%s5 + $0x1c8] sm:$0xff]
  %v1553 = vld [vmem:[%s5 + $0x1d0] sm:$0xff]
  %v1554 = vld [vmem:[%s5 + $0x1d8] sm:$0xff]
  %v1555 = vld [vmem:[%s5 + $0x1e0] sm:$0xff]
  %v1556 = vld [vmem:[%s5 + $0x1e8] sm:$0xff]
  %v1557 = vld [vmem:[%s5 + $0x1f0] sm:$0xff]
  %v1558 = vld [vmem:[%s5 + $0x1f8] sm:$0xff]
  %v1559 = vld [vmem:[%s5 + $0x200] sm:$0xff]
  %v1560 = vld [vmem:[%s5 + $0x208] sm:$0xff]
  %v1561 = vld [vmem:[%s5 + $0x210] sm:$0xff]
  %v1562 = vld [vmem:[%s5 + $0x218] sm:$0xff]
  %v1563 = vld [vmem:[%s5 + $0x220] sm:$0xff]
  %v1564 = vld [vmem:[%s5 + $0x228] sm:$0xff]
  %v1565 = vld [vmem:[%s5 + $0x230] sm:$0xff]
  %v1566 = vld [vmem:[%s5 + $0x238] sm:$0xff]
  %v1567 = vld [vmem:[%s5 + $0x240] sm:$0xff]
  %v1568 = vld [vmem:[%s5 + $0x248] sm:$0xff]
  %v1569 = vld [vmem:[%s5 + $0x250] sm:$0xff]
  %v1570 = vld [vmem:[%s5 + $0x258] sm:$0xff]
  %v1571 = vld [vmem:[%s5 + $0x260] sm:$0xff]
  %v1572 = vld [vmem:[%s5 + $0x268] sm:$0xff]
  %v1573 = vld [vmem:[%s5 + $0x270] sm:$0xff]
  %v1574 = vld [vmem:[%s5 + $0x278] sm:$0xff]
  %v1575 = vld [vmem:[%s5 + $0x280] sm:$0xff]
  %v1576 = vld [vmem:[%s5 + $0x288] sm:$0xff]
  %v1577 = vld [vmem:[%s5 + $0x290] sm:$0xff]
  %v1578 = vld [vmem:[%s5 + $0x298] sm:$0xff]
  %v1579 = vld [vmem:[%s5 + $0x2a0] sm:$0xff]
  %v1580 = vld [vmem:[%s5 + $0x2a8] sm:$0xff]
  %v1581 = vld [vmem:[%s5 + $0x2b0] sm:$0xff]
  %v1582 = vld [vmem:[%s5 + $0x2b8] sm:$0xff]
  %v1583 = vld [vmem:[%s5 + $0x2c0] sm:$0xff]
  %v1584 = vld [vmem:[%s5 + $0x2c8] sm:$0xff]
  %v1585 = vld [vmem:[%s5 + $0x2d0] sm:$0xff]
  %v1586 = vld [vmem:[%s5 + $0x2d8] sm:$0xff]
  %v1587 = vld [vmem:[%s5 + $0x2e0] sm:$0xff]
  %v1588 = vld [vmem:[%s5 + $0x2e8] sm:$0xff]
  %v1589 = vld [vmem:[%s5 + $0x2f0] sm:$0xff]
  %v1590 = vld [vmem:[%s5 + $0x2f8] sm:$0xff]
  %v1591 = vld [vmem:[%s5 + $0x300] sm:$0xff]
  %v1592 = vld [vmem:[%s5 + $0x308] sm:$0xff]
  %v1593 = vld [vmem:[%s5 + $0x310] sm:$0xff]
  %v1594 = vld [vmem:[%s5 + $0x318] sm:$0xff]
  %v1595 = vld [vmem:[%s5 + $0x320] sm:$0xff]
  %v1596 = vld [vmem:[%s5 + $0x328] sm:$0xff]
  %v1597 = vld [vmem:[%s5 + $0x330] sm:$0xff]
  %v1598 = vld [vmem:[%s5 + $0x338] sm:$0xff]
  %v1599 = vld [vmem:[%s5 + $0x340] sm:$0xff]
  %v1600 = vld [vmem:[%s5 + $0x348] sm:$0xff]
  %v1601 = vld [vmem:[%s5 + $0x350] sm:$0xff]
  %v1602 = vld [vmem:[%s5 + $0x358] sm:$0xff]
  %v1603 = vld [vmem:[%s5 + $0x360] sm:$0xff]
  %v1604 = vld [vmem:[%s5 + $0x368] sm:$0xff]
  %v1605 = vld [vmem:[%s5 + $0x370] sm:$0xff]
  %v1606 = vld [vmem:[%s5 + $0x378] sm:$0xff]
  %v1607 = vld [vmem:[%s5 + $0x380] sm:$0xff]
  %v1608 = vld [vmem:[%s5 + $0x388] sm:$0xff]
  %v1609 = vld [vmem:[%s5 + $0x390] sm:$0xff]
  %v1610 = vld [vmem:[%s5 + $0x398] sm:$0xff]
  %v1611 = vld [vmem:[%s5 + $0x3a0] sm:$0xff]
  %v1612 = vld [vmem:[%s5 + $0x3a8] sm:$0xff]
  %v1613 = vld [vmem:[%s5 + $0x3b0] sm:$0xff]
  %v1614 = vld [vmem:[%s5 + $0x3b8] sm:$0xff]
  %v1615 = vld [vmem:[%s5 + $0x3c0] sm:$0xff]
  %v1616 = vld [vmem:[%s5 + $0x3c8] sm:$0xff]
  %v1617 = vld [vmem:[%s5 + $0x3d0] sm:$0xff]
  %v1618 = vld [vmem:[%s5 + $0x3d8] sm:$0xff]
  %v1619 = vld [vmem:[%s5 + $0x3e0] sm:$0xff]
  %v1620 = vld [vmem:[%s5 + $0x3e8] sm:$0xff]
  %v1621 = vld [vmem:[%s5 + $0x3f0] sm:$0xff]
  %v1622 = vld [vmem:[%s5 + $0x3f8] sm:$0xff]
  %v1623 = vld [vmem:[%s5 + $0x400] sm:$0xff]
  %v1624 = vld [vmem:[%s5 + $0x408] sm:$0xff]
  %v1625 = vld [vmem:[%s5 + $0x410] sm:$0xff]
  %v1626 = vld [vmem:[%s5 + $0x418] sm:$0xff]
  %v1627 = vld [vmem:[%s5 + $0x420] sm:$0xff]
  %v1628 = vld [vmem:[%s5 + $0x428] sm:$0xff]
  %v1629 = vld [vmem:[%s5 + $0x430] sm:$0xff]
  %v1630 = vld [vmem:[%s5 + $0x438] sm:$0xff]
  %v1631 = vld [vmem:[%s5 + $0x440] sm:$0xff]
  %v1632 = vld [vmem:[%s5 + $0x448] sm:$0xff]
  %v1633 = vld [vmem:[%s5 + $0x450] sm:$0xff]
  %v1634 = vld [vmem:[%s5 + $0x458] sm:$0xff]
  %v1635 = vld [vmem:[%s5 + $0x460] sm:$0xff]
  %v1636 = vld [vmem:[%s5 + $0x468] sm:$0xff]
  %v1637 = vld [vmem:[%s5 + $0x470] sm:$0xff]
  %v1638 = vld [vmem:[%s5 + $0x478] sm:$0xff]
  %1639 = vmatprep.subr.mxu0 0.0
  %1640 = vmatpush1.msra.mxu0 %v1510
  %1641 = vmatprep.subr.mxu0 0.0
  %1642 = vmatpush1.msra.mxu0 %v1509
  %1643 = vmatprep.subr.mxu0 0.0
  %1644 = vmatpush1.msra.mxu0 %v1508
  %1645 = vmatprep.subr.mxu0 0.0
  %1646 = vmatpush1.msra.mxu0 %v1507
  %1647 = vmatprep.subr.mxu0 0.0
  %1648 = vmatpush1.msra.mxu0 %v1506
  %1649 = vmatprep.subr.mxu0 0.0
  %1650 = vmatpush1.msra.mxu0 %v1505
  %1651 = vmatprep.subr.mxu0 0.0
  %1652 = vmatpush1.msra.mxu0 %v1504
  %1653 = vmatprep.subr.mxu0 0.0
  %1654 = vmatpush1.msra.mxu0 %v1503
  %1655 = vmatprep.subr.mxu0 0.0
  %1656 = vmatpush1.msra.mxu0 %v1502
  %1657 = vmatprep.subr.mxu0 0.0
  %1658 = vmatpush1.msra.mxu0 %v1501
  %1659 = vmatprep.subr.mxu0 0.0
  %1660 = vmatpush1.msra.mxu0 %v1500
  %1661 = vmatprep.subr.mxu0 0.0
  %1662 = vmatpush1.msra.mxu0 %v1499
  %1663 = vmatprep.subr.mxu0 0.0
  %1664 = vmatpush1.msra.mxu0 %v1498
  %1665 = vmatprep.subr.mxu0 0.0
  %1666 = vmatpush1.msra.mxu0 %v1497
  %1667 = vmatprep.subr.mxu0 0.0
  %1668 = vmatpush1.msra.mxu0 %v1496
  %1669 = vmatprep.subr.mxu0 0.0
  %1670 = vmatpush1.msra.mxu0 %v1495
  %1671 = vmatprep.subr.mxu0 0.0
  %1672 = vmatpush2.msra.mxu0 %v1526
  %1673 = vmatprep.subr.mxu0 0.0
  %1674 = vmatpush2.msra.mxu0 %v1525
  %1675 = vmatprep.subr.mxu0 0.0
  %1676 = vmatpush2.msra.mxu0 %v1524
  %1677 = vmatprep.subr.mxu0 0.0
  %1678 = vmatpush2.msra.mxu0 %v1523
  %1679 = vmatprep.subr.mxu0 0.0
  %1680 = vmatpush2.msra.mxu0 %v1522
  %1681 = vmatprep.subr.mxu0 0.0
  %1682 = vmatpush2.msra.mxu0 %v1521
  %1683 = vmatprep.subr.mxu0 0.0
  %1684 = vmatpush2.msra.mxu0 %v1520
  %1685 = vmatprep.subr.mxu0 0.0
  %1686 = vmatpush2.msra.mxu0 %v1519
  %1687 = vmatprep.subr.mxu0 0.0
  %1688 = vmatpush2.msra.mxu0 %v1518
  %1689 = vmatprep.subr.mxu0 0.0
  %1690 = vmatpush2.msra.mxu0 %v1517
  %1691 = vmatprep.subr.mxu0 0.0
  %1692 = vmatpush2.msra.mxu0 %v1516
  %1693 = vmatprep.subr.mxu0 0.0
  %1694 = vmatpush2.msra.mxu0 %v1515
  %1695 = vmatprep.subr.mxu0 0.0
  %1696 = vmatpush2.msra.mxu0 %v1514
  %1697 = vmatprep.subr.mxu0 0.0
  %1698 = vmatpush2.msra.mxu0 %v1513
  %1699 = vmatprep.subr.mxu0 0.0
  %1700 = vmatpush2.msra.mxu0 %v1512
  %1701 = vmatprep.subr.mxu0 0.0
  %1702 = vmatpush2.msra.mxu0 %v1511
  %1703 = vmatprep.mubr.f32.mxu0 %v1457
  %1704 = vmatmul.mubr.f32.gmra.mxu0 %v1452
  %v1705 = vpop.f32.mrf.mxu0
  %v1706 = vadd.f32 0.0, %v1705
  %v1707 = vpop.f32.mrf.mxu0
  %1708 = vdwg.mxu0
  %1709 = vmatprep.subr.mxu0 0.0
  %1710 = vmatpush1.msra.mxu0 %v1542
  %1711 = vmatprep.subr.mxu0 0.0
  %1712 = vmatpush1.msra.mxu0 %v1541
  %1713 = vmatprep.subr.mxu0 0.0
  %1714 = vmatpush1.msra.mxu0 %v1540
  %1715 = vmatprep.subr.mxu0 0.0
  %1716 = vmatpush1.msra.mxu0 %v1539
  %1717 = vmatprep.subr.mxu0 0.0
  %1718 = vmatpush1.msra.mxu0 %v1538
  %1719 = vmatprep.subr.mxu0 0.0
  %1720 = vmatpush1.msra.mxu0 %v1537
  %1721 = vmatprep.subr.mxu0 0.0
  %1722 = vmatpush1.msra.mxu0 %v1536
  %1723 = vmatprep.subr.mxu0 0.0
  %1724 = vmatpush1.msra.mxu0 %v1535
  %1725 = vmatprep.subr.mxu0 0.0
  %1726 = vmatpush1.msra.mxu0 %v1534
  %1727 = vmatprep.subr.mxu0 0.0
  %1728 = vmatpush1.msra.mxu0 %v1533
  %1729 = vmatprep.subr.mxu0 0.0
  %1730 = vmatpush1.msra.mxu0 %v1532
  %1731 = vmatprep.subr.mxu0 0.0
  %1732 = vmatpush1.msra.mxu0 %v1531
  %1733 = vmatprep.subr.mxu0 0.0
  %1734 = vmatpush1.msra.mxu0 %v1530
  %1735 = vmatprep.subr.mxu0 0.0
  %1736 = vmatpush1.msra.mxu0 %v1529
  %1737 = vmatprep.subr.mxu0 0.0
  %1738 = vmatpush1.msra.mxu0 %v1528
  %1739 = vmatprep.subr.mxu0 0.0
  %1740 = vmatpush1.msra.mxu0 %v1527
  %1741 = vmatprep.subr.mxu0 0.0
  %1742 = vmatpush2.msra.mxu0 %v1558
  %1743 = vmatprep.subr.mxu0 0.0
  %1744 = vmatpush2.msra.mxu0 %v1557
  %1745 = vmatprep.subr.mxu0 0.0
  %1746 = vmatpush2.msra.mxu0 %v1556
  %1747 = vmatprep.subr.mxu0 0.0
  %1748 = vmatpush2.msra.mxu0 %v1555
  %1749 = vmatprep.subr.mxu0 0.0
  %1750 = vmatpush2.msra.mxu0 %v1554
  %1751 = vmatprep.subr.mxu0 0.0
  %1752 = vmatpush2.msra.mxu0 %v1553
  %1753 = vmatprep.subr.mxu0 0.0
  %1754 = vmatpush2.msra.mxu0 %v1552
  %1755 = vmatprep.subr.mxu0 0.0
  %1756 = vmatpush2.msra.mxu0 %v1551
  %1757 = vmatprep.subr.mxu0 0.0
  %1758 = vmatpush2.msra.mxu0 %v1550
  %1759 = vmatprep.subr.mxu0 0.0
  %1760 = vmatpush2.msra.mxu0 %v1549
  %1761 = vmatprep.subr.mxu0 0.0
  %1762 = vmatpush2.msra.mxu0 %v1548
  %1763 = vmatprep.subr.mxu0 0.0
  %1764 = vmatpush2.msra.mxu0 %v1547
  %1765 = vmatprep.subr.mxu0 0.0
  %1766 = vmatpush2.msra.mxu0 %v1546
  %1767 = vmatprep.subr.mxu0 0.0
  %1768 = vmatpush2.msra.mxu0 %v1545
  %1769 = vmatprep.subr.mxu0 0.0
  %1770 = vmatpush2.msra.mxu0 %v1544
  %1771 = vmatprep.subr.mxu0 0.0
  %1772 = vmatpush2.msra.mxu0 %v1543
  %1773 = vmatprep.mubr.f32.mxu0 %v1467
  %1774 = vmatmul.mubr.f32.gmra.mxu0 %v1462
  %v1775 = vpop.f32.mrf.mxu0
  %v1776 = vadd.f32 %v1706, %v1775
  %v1777 = vpop.f32.mrf.mxu0
  %1778 = vdwg.mxu0
  %1779 = vmatprep.subr.mxu0 0.0
  %1780 = vmatpush1.msra.mxu0 %v1574
  %1781 = vmatprep.subr.mxu0 0.0
  %1782 = vmatpush1.msra.mxu0 %v1573
  %1783 = vmatprep.subr.mxu0 0.0
  %1784 = vmatpush1.msra.mxu0 %v1572
  %1785 = vmatprep.subr.mxu0 0.0
  %1786 = vmatpush1.msra.mxu0 %v1571
  %1787 = vmatprep.subr.mxu0 0.0
  %1788 = vmatpush1.msra.mxu0 %v1570
  %1789 = vmatprep.subr.mxu0 0.0
  %1790 = vmatpush1.msra.mxu0 %v1569
  %1791 = vmatprep.subr.mxu0 0.0
  %1792 = vmatpush1.msra.mxu0 %v1568
  %1793 = vmatprep.subr.mxu0 0.0
  %1794 = vmatpush1.msra.mxu0 %v1567
  %1795 = vmatprep.subr.mxu0 0.0
  %1796 = vmatpush1.msra.mxu0 %v1566
  %1797 = vmatprep.subr.mxu0 0.0
  %1798 = vmatpush1.msra.mxu0 %v1565
  %1799 = vmatprep.subr.mxu0 0.0
  %1800 = vmatpush1.msra.mxu0 %v1564
  %1801 = vmatprep.subr.mxu0 0.0
  %1802 = vmatpush1.msra.mxu0 %v1563
  %1803 = vmatprep.subr.mxu0 0.0
  %1804 = vmatpush1.msra.mxu0 %v1562
  %1805 = vmatprep.subr.mxu0 0.0
  %1806 = vmatpush1.msra.mxu0 %v1561
  %1807 = vmatprep.subr.mxu0 0.0
  %1808 = vmatpush1.msra.mxu0 %v1560
  %1809 = vmatprep.subr.mxu0 0.0
  %1810 = vmatpush1.msra.mxu0 %v1559
  %1811 = vmatprep.subr.mxu0 0.0
  %1812 = vmatpush2.msra.mxu0 %v1590
  %1813 = vmatprep.subr.mxu0 0.0
  %1814 = vmatpush2.msra.mxu0 %v1589
  %1815 = vmatprep.subr.mxu0 0.0
  %1816 = vmatpush2.msra.mxu0 %v1588
  %1817 = vmatprep.subr.mxu0 0.0
  %1818 = vmatpush2.msra.mxu0 %v1587
  %1819 = vmatprep.subr.mxu0 0.0
  %1820 = vmatpush2.msra.mxu0 %v1586
  %1821 = vmatprep.subr.mxu0 0.0
  %1822 = vmatpush2.msra.mxu0 %v1585
  %1823 = vmatprep.subr.mxu0 0.0
  %1824 = vmatpush2.msra.mxu0 %v1584
  %1825 = vmatprep.subr.mxu0 0.0
  %1826 = vmatpush2.msra.mxu0 %v1583
  %1827 = vmatprep.subr.mxu0 0.0
  %1828 = vmatpush2.msra.mxu0 %v1582
  %1829 = vmatprep.subr.mxu0 0.0
  %1830 = vmatpush2.msra.mxu0 %v1581
  %1831 = vmatprep.subr.mxu0 0.0
  %1832 = vmatpush2.msra.mxu0 %v1580
  %1833 = vmatprep.subr.mxu0 0.0
  %1834 = vmatpush2.msra.mxu0 %v1579
  %1835 = vmatprep.subr.mxu0 0.0
  %1836 = vmatpush2.msra.mxu0 %v1578
  %1837 = vmatprep.subr.mxu0 0.0
  %1838 = vmatpush2.msra.mxu0 %v1577
  %1839 = vmatprep.subr.mxu0 0.0
  %1840 = vmatpush2.msra.mxu0 %v1576
  %1841 = vmatprep.subr.mxu0 0.0
  %1842 = vmatpush2.msra.mxu0 %v1575
  %1843 = vmatprep.mubr.f32.mxu0 %v1477
  %1844 = vmatmul.mubr.f32.gmra.mxu0 %v1472
  %v1845 = vpop.f32.mrf.mxu0
  %v1846 = vadd.f32 %v1776, %v1845
  %v1847 = vpop.f32.mrf.mxu0
  %1848 = vdwg.mxu0
  %1849 = vmatprep.subr.mxu0 0.0
  %1850 = vmatpush1.msra.mxu0 %v1606
  %1851 = vmatprep.subr.mxu0 0.0
  %1852 = vmatpush1.msra.mxu0 %v1605
  %1853 = vmatprep.subr.mxu0 0.0
  %1854 = vmatpush1.msra.mxu0 %v1604
  %1855 = vmatprep.subr.mxu0 0.0
  %1856 = vmatpush1.msra.mxu0 %v1603
  %1857 = vmatprep.subr.mxu0 0.0
  %1858 = vmatpush1.msra.mxu0 %v1602
  %1859 = vmatprep.subr.mxu0 0.0
  %1860 = vmatpush1.msra.mxu0 %v1601
  %1861 = vmatprep.subr.mxu0 0.0
  %1862 = vmatpush1.msra.mxu0 %v1600
  %1863 = vmatprep.subr.mxu0 0.0
  %1864 = vmatpush1.msra.mxu0 %v1599
  %1865 = vmatprep.subr.mxu0 0.0
  %1866 = vmatpush1.msra.mxu0 %v1598
  %1867 = vmatprep.subr.mxu0 0.0
  %1868 = vmatpush1.msra.mxu0 %v1597
  %1869 = vmatprep.subr.mxu0 0.0
  %1870 = vmatpush1.msra.mxu0 %v1596
  %1871 = vmatprep.subr.mxu0 0.0
  %1872 = vmatpush1.msra.mxu0 %v1595
  %1873 = vmatprep.subr.mxu0 0.0
  %1874 = vmatpush1.msra.mxu0 %v1594
  %1875 = vmatprep.subr.mxu0 0.0
  %1876 = vmatpush1.msra.mxu0 %v1593
  %1877 = vmatprep.subr.mxu0 0.0
  %1878 = vmatpush1.msra.mxu0 %v1592
  %1879 = vmatprep.subr.mxu0 0.0
  %1880 = vmatpush1.msra.mxu0 %v1591
  %1881 = vmatprep.subr.mxu0 0.0
  %1882 = vmatpush2.msra.mxu0 %v1622
  %1883 = vmatprep.subr.mxu0 0.0
  %1884 = vmatpush2.msra.mxu0 %v1621
  %1885 = vmatprep.subr.mxu0 0.0
  %1886 = vmatpush2.msra.mxu0 %v1620
  %1887 = vmatprep.subr.mxu0 0.0
  %1888 = vmatpush2.msra.mxu0 %v1619
  %1889 = vmatprep.subr.mxu0 0.0
  %1890 = vmatpush2.msra.mxu0 %v1618
  %1891 = vmatprep.subr.mxu0 0.0
  %1892 = vmatpush2.msra.mxu0 %v1617
  %1893 = vmatprep.subr.mxu0 0.0
  %1894 = vmatpush2.msra.mxu0 %v1616
  %1895 = vmatprep.subr.mxu0 0.0
  %1896 = vmatpush2.msra.mxu0 %v1615
  %1897 = vmatprep.subr.mxu0 0.0
  %1898 = vmatpush2.msra.mxu0 %v1614
  %1899 = vmatprep.subr.mxu0 0.0
  %1900 = vmatpush2.msra.mxu0 %v1613
  %1901 = vmatprep.subr.mxu0 0.0
  %1902 = vmatpush2.msra.mxu0 %v1612
  %1903 = vmatprep.subr.mxu0 0.0
  %1904 = vmatpush2.msra.mxu0 %v1611
  %1905 = vmatprep.subr.mxu0 0.0
  %1906 = vmatpush2.msra.mxu0 %v1610
  %1907 = vmatprep.subr.mxu0 0.0
  %1908 = vmatpush2.msra.mxu0 %v1609
  %1909 = vmatprep.subr.mxu0 0.0
  %1910 = vmatpush2.msra.mxu0 %v1608
  %1911 = vmatprep.subr.mxu0 0.0
  %1912 = vmatpush2.msra.mxu0 %v1607
  %1913 = vmatprep.mubr.f32.mxu0 %v1487
  %1914 = vmatmul.mubr.f32.gmra.mxu0 %v1482
  %v1915 = vpop.f32.mrf.mxu0
  %v1916 = vadd.f32 %v1846, %v1915
  %v1917 = vpop.f32.mrf.mxu0
  %1918 = vdwg.mxu0
  %1919 = vmatprep.subr.mxu0 0.0
  %1920 = vmatpush1.msra.mxu0 %v1638
  %1921 = vmatprep.subr.mxu0 0.0
  %1922 = vmatpush1.msra.mxu0 %v1637
  %1923 = vmatprep.subr.mxu0 0.0
  %1924 = vmatpush1.msra.mxu0 %v1636
  %1925 = vmatprep.subr.mxu0 0.0
  %1926 = vmatpush1.msra.mxu0 %v1635
  %1927 = vmatprep.subr.mxu0 0.0
  %1928 = vmatpush1.msra.mxu0 %v1634
  %1929 = vmatprep.subr.mxu0 0.0
  %1930 = vmatpush1.msra.mxu0 %v1633
  %1931 = vmatprep.subr.mxu0 0.0
  %1932 = vmatpush1.msra.mxu0 %v1632
  %1933 = vmatprep.subr.mxu0 0.0
  %1934 = vmatpush1.msra.mxu0 %v1631
  %1935 = vmatprep.subr.mxu0 0.0
  %1936 = vmatpush1.msra.mxu0 %v1630
  %1937 = vmatprep.subr.mxu0 0.0
  %1938 = vmatpush1.msra.mxu0 %v1629
  %1939 = vmatprep.subr.mxu0 0.0
  %1940 = vmatpush1.msra.mxu0 %v1628
  %1941 = vmatprep.subr.mxu0 0.0
  %1942 = vmatpush1.msra.mxu0 %v1627
  %1943 = vmatprep.subr.mxu0 0.0
  %1944 = vmatpush1.msra.mxu0 %v1626
  %1945 = vmatprep.subr.mxu0 0.0
  %1946 = vmatpush1.msra.mxu0 %v1625
  %1947 = vmatprep.subr.mxu0 0.0
  %1948 = vmatpush1.msra.mxu0 %v1624
  %1949 = vmatprep.subr.mxu0 0.0
  %1950 = vmatpush1.msra.mxu0 %v1623
  %1951 = vmatprep.subr.mxu0 0.0
  %1952 = vmatpush2.msra.mxu0 0.0
  %1953 = vmatprep.subr.mxu0 0.0
  %1954 = vmatpush2.msra.mxu0 0.0
  %1955 = vmatprep.subr.mxu0 0.0
  %1956 = vmatpush2.msra.mxu0 0.0
  %1957 = vmatprep.subr.mxu0 0.0
  %1958 = vmatpush2.msra.mxu0 0.0
  %1959 = vmatprep.subr.mxu0 0.0
  %1960 = vmatpush2.msra.mxu0 0.0
  %1961 = vmatprep.subr.mxu0 0.0
  %1962 = vmatpush2.msra.mxu0 0.0
  %1963 = vmatprep.subr.mxu0 0.0
  %1964 = vmatpush2.msra.mxu0 0.0
  %1965 = vmatprep.subr.mxu0 0.0
  %1966 = vmatpush2.msra.mxu0 0.0
  %1967 = vmatprep.subr.mxu0 0.0
  %1968 = vmatpush2.msra.mxu0 0.0
  %1969 = vmatprep.subr.mxu0 0.0
  %1970 = vmatpush2.msra.mxu0 0.0
  %1971 = vmatprep.subr.mxu0 0.0
  %1972 = vmatpush2.msra.mxu0 0.0
  %1973 = vmatprep.subr.mxu0 0.0
  %1974 = vmatpush2.msra.mxu0 0.0
  %1975 = vmatprep.subr.mxu0 0.0
  %1976 = vmatpush2.msra.mxu0 0.0
  %1977 = vmatprep.subr.mxu0 0.0
  %1978 = vmatpush2.msra.mxu0 0.0
  %1979 = vmatprep.subr.mxu0 0.0
  %1980 = vmatpush2.msra.mxu0 0.0
  %1981 = vmatprep.subr.mxu0 0.0
  %1982 = vmatpush2.msra.mxu0 0.0
  %1983 = vmatprep.mubr.f32.mxu0 0.0
  %1984 = vmatmul.mubr.f32.gmra.mxu0 %v1492
  %v1985 = vpop.f32.mrf.mxu0
  %v1986 = vadd.f32 %v1916, %v1985
  %v1987 = vpop.f32.mrf.mxu0
  %1988 = vdwg.mxu0
  %v1989 = vld [vmem:[%s8 + $0x4] sm:$0x1]
  %v1990 = vld [vmem:[%s8 + $0x5] sm:$0x1]
  %v1991 = vrot.slane %v1986, 4
  %v1992 = vadd.f32 %v1986, %v1991
  %v1993 = vrot.slane %v1992, 2
  %v1994 = vadd.f32 %v1992, %v1993
  %v1995 = vrot.slane %v1994, 1
  %v1996 = vadd.f32 %v1994, %v1995
  %v1997 = vmul.f32 %v1996, 0.125
  %v1998 = vsub.f32 %v1986, %v1997
  %v1999 = vmul.f32 %v1998, %v1998
  %v2000 = vrot.slane %v1999, 4
  %v2001 = vadd.f32 %v1999, %v2000
  %v2002 = vrot.slane %v2001, 2
  %v2003 = vadd.f32 %v2001, %v2002
  %v2004 = vrot.slane %v2003, 1
  %v2005 = vadd.f32 %v2003, %v2004
  %v2006 = vmul.f32 %v2005, 0.125
  %v2007 = vadd.f32 %v2006, 1e-05
  %v2008 = vrsqrt.pop %v2007
  %v2009 = vmul.f32 %v1998, %v2008
  %v2010 = vlaneseq
  %v2011 = vshrl.u32 %v2010, 7
  %v2012 = vsub.s32 0, %v2011
  %v2013 = vrot.slane %v1989, %v2012
  %v2014 = vmul.f32 %v2013, %v2009
  %v2015 = vlaneseq
  %v2016 = vshrl.u32 %v2015, 7
  %v2017 = vsub.s32 0, %v2016
  %v2018 = vrot.slane %v1990, %v2017
  %v2019 = vadd.f32 %v2014, %v2018
  %v2020 = vld [vmem:[%s6] sm:$0xff]
  %vm2021 = vcmask 64512
  %v2023 = vsel %vm2021, %v2020, 0
  %2025 = vmatprep.subr.mxu0 0.0
  %2026 = vmatpush1.msra.mxu0 0.0
  %2027 = vmatprep.subr.mxu0 0.0
  %2028 = vmatpush1.msra.mxu0 0.0
  %2029 = vmatprep.subr.mxu0 0.0
  %2030 = vmatpush1.msra.mxu0 0.0
  %2031 = vmatprep.subr.mxu0 0.0
  %2032 = vmatpush1.msra.mxu0 0.0
  %2033 = vmatprep.subr.mxu0 0.0
  %2034 = vmatpush1.msra.mxu0 0.0
  %2035 = vmatprep.subr.mxu0 0.0
  %2036 = vmatpush1.msra.mxu0 0.0
  %2037 = vmatprep.subr.mxu0 0.0
  %2038 = vmatpush1.msra.mxu0 0.0
  %2039 = vmatprep.subr.mxu0 0.0
  %2040 = vmatpush1.msra.mxu0 0.0
  %2041 = vmatprep.subr.mxu0 0.0
  %2042 = vmatpush1.msra.mxu0 0.0
  %2043 = vmatprep.subr.mxu0 0.0
  %2044 = vmatpush1.msra.mxu0 0.0
  %2045 = vmatprep.subr.mxu0 0.0
  %2046 = vmatpush1.msra.mxu0 0.0
  %2047 = vmatprep.subr.mxu0 0.0
  %2048 = vmatpush1.msra.mxu0 0.0
  %2049 = vmatprep.subr.mxu0 0.0
  %2050 = vmatpush1.msra.mxu0 0.0
  %2051 = vmatprep.subr.mxu0 0.0
  %2052 = vmatpush1.msra.mxu0 0.0
  %2053 = vmatprep.subr.mxu0 0.0
  %2054 = vmatpush1.msra.mxu0 0.0
  %2055 = vmatprep.subr.mxu0 0.0
  %2056 = vmatpush1.msra.mxu0 %v2019
  %2057 = vmatprep.subr.mxu0 0.0
  %2058 = vmatpush2.msra.mxu0 0.0
  %2059 = vmatprep.subr.mxu0 0.0
  %2060 = vmatpush2.msra.mxu0 0.0
  %2061 = vmatprep.subr.mxu0 0.0
  %2062 = vmatpush2.msra.mxu0 0.0
  %2063 = vmatprep.subr.mxu0 0.0
  %2064 = vmatpush2.msra.mxu0 0.0
  %2065 = vmatprep.subr.mxu0 0.0
  %2066 = vmatpush2.msra.mxu0 0.0
  %2067 = vmatprep.subr.mxu0 0.0
  %2068 = vmatpush2.msra.mxu0 0.0
  %2069 = vmatprep.subr.mxu0 0.0
  %2070 = vmatpush2.msra.mxu0 0.0
  %2071 = vmatprep.subr.mxu0 0.0
  %2072 = vmatpush2.msra.mxu0 0.0
  %2073 = vmatprep.subr.mxu0 0.0
  %2074 = vmatpush2.msra.mxu0 0.0
  %2075 = vmatprep.subr.mxu0 0.0
  %2076 = vmatpush2.msra.mxu0 0.0
  %2077 = vmatprep.subr.mxu0 0.0
  %2078 = vmatpush2.msra.mxu0 0.0
  %2079 = vmatprep.subr.mxu0 0.0
  %2080 = vmatpush2.msra.mxu0 0.0
  %2081 = vmatprep.subr.mxu0 0.0
  %2082 = vmatpush2.msra.mxu0 0.0
  %2083 = vmatprep.subr.mxu0 0.0
  %2084 = vmatpush2.msra.mxu0 0.0
  %2085 = vmatprep.subr.mxu0 0.0
  %2086 = vmatpush2.msra.mxu0 0.0
  %2087 = vmatprep.subr.mxu0 0.0
  %2088 = vmatpush2.msra.mxu0 0.0
  %2089 = vmatprep.mubr.f32.mxu0 0.0
  %2090 = vmatmul.mubr.f32.gmra.mxu0 %v2023
  %v2091 = vpop.f32.mrf.mxu0
  %v2092 = vadd.f32 0.0, %v2091
  %v2093 = vpop.f32.mrf.mxu0
  %2094 = vdwg.mxu0
  %v2095 = vld [vmem:[%s7] sm:$0xff]
  %v2096 = vld [vmem:[%s7 + $0x8] sm:$0xff]
  %v2097 = vld [vmem:[%s7 + $0x10] sm:$0xff]
  %v2098 = vld [vmem:[%s7 + $0x18] sm:$0xff]
  %v2099 = vld [vmem:[%s7 + $0x20] sm:$0xff]
  %v2100 = vld [vmem:[%s7 + $0x28] sm:$0xff]
  %v2101 = vld [vmem:[%s7 + $0x30] sm:$0xff]
  %v2102 = vld [vmem:[%s7 + $0x38] sm:$0xff]
  %v2103 = vld [vmem:[%s7 + $0x40] sm:$0xff]
  %v2104 = vld [vmem:[%s7 + $0x48] sm:$0xff]
  %v2105 = vld [vmem:[%s7 + $0x50] sm:$0xff]
  %v2106 = vld [vmem:[%s7 + $0x58] sm:$0xff]
  %v2107 = vld [vmem:[%s7 + $0x60] sm:$0xff]
  %v2108 = vld [vmem:[%s7 + $0x68] sm:$0xff]
  %v2109 = vld [vmem:[%s7 + $0x70] sm:$0xff]
  %v2110 = vld [vmem:[%s7 + $0x78] sm:$0xff]
  %v2111 = vld [vmem:[%s8 + $0x6] sm:$0x1]
  %v2112 = vlaneseq
  %v2113 = vshrl.u32 %v2112, 7
  %v2114 = vsub.s32 0, %v2113
  %v2115 = vrot.slane %v2111, %v2114
  %2116 = vmatprep.subr.mxu0 0.0
  %2117 = vmatpush1.msra.mxu0 %v2110
  %2118 = vmatprep.subr.mxu0 0.0
  %2119 = vmatpush1.msra.mxu0 %v2109
  %2120 = vmatprep.subr.mxu0 0.0
  %2121 = vmatpush1.msra.mxu0 %v2108
  %2122 = vmatprep.subr.mxu0 0.0
  %2123 = vmatpush1.msra.mxu0 %v2107
  %2124 = vmatprep.subr.mxu0 0.0
  %2125 = vmatpush1.msra.mxu0 %v2106
  %2126 = vmatprep.subr.mxu0 0.0
  %2127 = vmatpush1.msra.mxu0 %v2105
  %2128 = vmatprep.subr.mxu0 0.0
  %2129 = vmatpush1.msra.mxu0 %v2104
  %2130 = vmatprep.subr.mxu0 0.0
  %2131 = vmatpush1.msra.mxu0 %v2103
  %2132 = vmatprep.subr.mxu0 0.0
  %2133 = vmatpush1.msra.mxu0 %v2102
  %2134 = vmatprep.subr.mxu0 0.0
  %2135 = vmatpush1.msra.mxu0 %v2101
  %2136 = vmatprep.subr.mxu0 0.0
  %2137 = vmatpush1.msra.mxu0 %v2100
  %2138 = vmatprep.subr.mxu0 0.0
  %2139 = vmatpush1.msra.mxu0 %v2099
  %2140 = vmatprep.subr.mxu0 0.0
  %2141 = vmatpush1.msra.mxu0 %v2098
  %2142 = vmatprep.subr.mxu0 0.0
  %2143 = vmatpush1.msra.mxu0 %v2097
  %2144 = vmatprep.subr.mxu0 0.0
  %2145 = vmatpush1.msra.mxu0 %v2096
  %2146 = vmatprep.subr.mxu0 0.0
  %2147 = vmatpush1.msra.mxu0 %v2095
  %2148 = vmatprep.subr.mxu0 0.0
  %2149 = vmatpush2.msra.mxu0 0.0
  %2150 = vmatprep.subr.mxu0 0.0
  %2151 = vmatpush2.msra.mxu0 0.0
  %2152 = vmatprep.subr.mxu0 0.0
  %2153 = vmatpush2.msra.mxu0 0.0
  %2154 = vmatprep.subr.mxu0 0.0
  %2155 = vmatpush2.msra.mxu0 0.0
  %2156 = vmatprep.subr.mxu0 0.0
  %2157 = vmatpush2.msra.mxu0 0.0
  %2158 = vmatprep.subr.mxu0 0.0
  %2159 = vmatpush2.msra.mxu0 0.0
  %2160 = vmatprep.subr.mxu0 0.0
  %2161 = vmatpush2.msra.mxu0 0.0
  %2162 = vmatprep.subr.mxu0 0.0
  %2163 = vmatpush2.msra.mxu0 0.0
  %2164 = vmatprep.subr.mxu0 0.0
  %2165 = vmatpush2.msra.mxu0 0.0
  %2166 = vmatprep.subr.mxu0 0.0
  %2167 = vmatpush2.msra.mxu0 0.0
  %2168 = vmatprep.subr.mxu0 0.0
  %2169 = vmatpush2.msra.mxu0 0.0
  %2170 = vmatprep.subr.mxu0 0.0
  %2171 = vmatpush2.msra.mxu0 0.0
  %2172 = vmatprep.subr.mxu0 0.0
  %2173 = vmatpush2.msra.mxu0 0.0
  %2174 = vmatprep.subr.mxu0 0.0
  %2175 = vmatpush2.msra.mxu0 0.0
  %2176 = vmatprep.subr.mxu0 0.0
  %2177 = vmatpush2.msra.mxu0 0.0
  %2178 = vmatprep.subr.mxu0 0.0
  %2179 = vmatpush2.msra.mxu0 0.0
  %2180 = vmatprep.mubr.f32.mxu0 0.0
  %2181 = vmatmul.mubr.f32.gmra.mxu0 %v2092
  %v2182 = vpop.f32.mrf.mxu0
  %v2183 = vadd.f32 %v2115, %v2182
  %v2184 = vpop.f32.mrf.mxu0
  %2185 = vdwg.mxu0
  %2186 = vst [vmem:[%s9] sm:$0xff] %v2183
  // Predicated region
  $region38: #{layer3_forward.1} parent=0 // pred_check
    _
  $region39: #{layer3_forward.1} parent=0 // pred_check_branch
    %2188 = sbr.rel (0) target = $region41
  $region40: #{layer3_forward.1} parent=0 // pred_region
    _
  $region41: #{layer3_forward.1} parent=0 // pred_fallthru
    _
  // Predicated region
  $region42: #{layer3_forward.1} parent=0 // pred_check
    _
  $region43: #{layer3_forward.1} parent=0 // pred_check_branch
    %2190 = sbr.rel (0) target = $region45
  $region44: #{layer3_forward.1} parent=0 // pred_region
    _
  $region45: #{layer3_forward.1} parent=0 // pred_fallthru
    _

</llo_original>
